<compile_context>
chip_gen: v7x
topology: tpu7x:2x2x1
jax: 0.10.0
libtpu: 0.0.40
codegen_flags: <defaults>
</compile_context>

<pallas_src>
import functools
import math

import jax
import jax.numpy as jnp
from jax.experimental import pallas as pl
from jax.experimental.pallas import tpu as pltpu


def _round_up(x, m):
    return ((x + m - 1) // m) * m


def _cdiv(a, b):
    return -(-a // b)


def _feature_align():
    """Feature-dim alignment: 128 on v4/v5e (128-wide MXU), 256 on v6e/v7x."""
    try:
        kind = jax.devices()[0].device_kind.lower()
    except Exception:
        return 128
    if "v5 lite" in kind or "v5e" in kind or "v5lite" in kind or "v4" in kind:
        return 128
    return 256


def _vmem_capacity_bytes():
    """Per-core VMEM capacity; conservative 64 MiB (v7x) if the query fails."""
    try:
        return int(pltpu.get_tpu_info().vmem_capacity_bytes)
    except Exception:
        return 64 * 1024 * 1024


def _mlp_kernel(*refs, n_hidden: int, action_tanh: bool):
    """Full MLP hot path (matmuls + bias + ReLU + tanh) for one batch tile.

    With n_hidden > 0:
      x:(TM,in_p) bf16, w1:(in_p,nh_p) bf16, b1:(1,nh_p) f32,
      wh:(n_hidden,nh_p,nh_p) bf16, bh:(n_hidden,1,nh_p) f32,
      wo:(nh_p,in_p) bf16, bo:(1,in_p) f32, o:(TM,in_p) f32
    With n_hidden == 0 the wh/bh refs are absent.
    """
    if n_hidden > 0:
        x_ref, w1_ref, b1_ref, wh_ref, bh_ref, wo_ref, bo_ref, o_ref = refs
    else:
        x_ref, w1_ref, b1_ref, wo_ref, bo_ref, o_ref = refs
        wh_ref = bh_ref = None

    # Linear(in_dim, nh): bf16 MXU matmul, f32 accumulation, f32 bias add.
    h = jnp.dot(x_ref[...], w1_ref[...],
                preferred_element_type=jnp.float32) + b1_ref[...]

    # Hidden stack: ReLU -> Dropout(identity at inference) -> Linear(nh, nh).
    # Static Python loop == fully unrolled; keeps LLO scheduling visibility.
    # NOTE: bf16 re-quantization of activations compounds mildly with depth;
    # acceptable for typical nlayers, widen test tolerance for very deep stacks.
    for layer in range(n_hidden):
        h = jnp.maximum(h, 0.0).astype(jnp.bfloat16)
        h = jnp.dot(h, wh_ref[layer],
                    preferred_element_type=jnp.float32) + bh_ref[layer]

    # Final ReLU -> Dropout(identity) -> Linear(nh, in_dim) [-> Tanh].
    h = jnp.maximum(h, 0.0).astype(jnp.bfloat16)
    out = jnp.dot(h, wo_ref[...],
                  preferred_element_type=jnp.float32) + bo_ref[...]
    if action_tanh:
        out = jnp.tanh(out)   # EUP slot; effectively free next to the matmuls
    o_ref[...] = out.astype(o_ref.dtype)


def flexi_nn_forward(src, params, *, seq_len, cat_input_dim, nlayers, action_tanh):
    """src: (B, seq_len, cat_input_dim) -> (B, seq_len, cat_input_dim) float32."""
    B = src.shape[0]
    in_dim = cat_input_dim * seq_len
    nh = params["w1"].shape[1]
    n_hidden = nlayers - 1

    # --- feature-dim padding to lane/MXU width (zeros preserve the math) ---
    align = _feature_align()
    in_p = _round_up(in_dim, align)
    nh_p = _round_up(nh, align)

    # --- batch tiling: minimal padding, >=2 tiles for v7x's two TCs ---------
    if B <= 8:
        num_tiles = 1
    else:
        num_tiles = max(2, _cdiv(B, 256))
    TM = _round_up(_cdiv(B, num_tiles), 8)
    padded_B = TM * num_tiles

    # Input: reshape, cast to bf16 first, then ONE pad pass (batch + feature).
    x = src.reshape(B, in_dim).astype(jnp.bfloat16)
    x = jnp.pad(x, ((0, padded_B - B), (0, in_p - in_dim)))

    # Weights bf16 (MXU operands), biases f32 (elementwise path is f32 on v5e),
    # all zero-padded to the aligned feature dims.
    w1 = jnp.pad(params["w1"].astype(jnp.bfloat16),
                 ((0, in_p - in_dim), (0, nh_p - nh)))
    b1 = jnp.pad(params["b1"].astype(jnp.float32), ((0, 0), (0, nh_p - nh)))
    wo = jnp.pad(params["wo"].astype(jnp.bfloat16),
                 ((0, nh_p - nh), (0, in_p - in_dim)))
    bo = jnp.pad(params["bo"].astype(jnp.float32), ((0, 0), (0, in_p - in_dim)))
    if n_hidden > 0:
        wh = jnp.pad(params["wh"].astype(jnp.bfloat16),
                     ((0, 0), (0, nh_p - nh), (0, nh_p - nh)))
        bh = jnp.pad(params["bh"].astype(jnp.float32),
                     ((0, 0), (0, 0), (0, nh_p - nh)))

    # --- cost estimate / VMEM budget (generation-aware) ---------------------
    weight_bytes = 2 * (in_p * nh_p + n_hidden * nh_p * nh_p + nh_p * in_p)  # bf16
    bias_bytes = 4 * ((1 + n_hidden) * nh_p + in_p)                          # f32
    io_bytes = padded_B * in_p * (2 + 4)                                     # bf16 in + f32 out
    flops = 2 * padded_B * (in_p * nh_p + n_hidden * nh_p * nh_p + nh_p * in_p)
    transcendentals = padded_B * in_p if action_tanh else 0
    cost = pl.CostEstimate(flops=flops, transcendentals=transcendentals,
                           bytes_accessed=weight_bytes + bias_bytes + io_bytes)

    tile_bytes = TM * in_p * (2 + 4)          # x tile (bf16) + out tile (f32)
    act_bytes = 2 * TM * nh_p * 4             # f32 intermediate headroom
    # Budget assuming the worst case (double-buffered weights fallback) plus
    # double-buffered activation tiles, with margin; never exceed the chip cap.
    vmem_needed = 2 * (weight_bytes + bias_bytes) + 2 * tile_bytes + act_bytes
    cap = _vmem_capacity_bytes()
    vmem_limit = int(min(max(2 * vmem_needed, 16 * 1024 * 1024),
                         max(cap - 2 * 1024 * 1024, 32 * 1024 * 1024)))

    grid = (num_tiles,)
    kernel = functools.partial(_mlp_kernel, n_hidden=n_hidden,
                               action_tanh=action_tanh)

    def run(single_buffer_weights):
        vmem = pltpu.MemorySpace.VMEM

        def wspec(shape):
            nd = len(shape)
            imap = lambda i, _nd=nd: (0,) * _nd
            if single_buffer_weights:
                # Constant index_map => never re-fetched; single buffer avoids
                # duplicating the resident weight footprint in VMEM.
                return pl.BlockSpec(shape, imap, memory_space=vmem,
                                    pipeline_mode=pl.Buffered(1))
            return pl.BlockSpec(shape, imap, memory_space=vmem)

        in_specs = [
            pl.BlockSpec((TM, in_p), lambda i: (i, 0), memory_space=vmem),  # x tile
            wspec((in_p, nh_p)),                                            # w1
            wspec((1, nh_p)),                                               # b1
        ]
        args = [x, w1, b1]
        if n_hidden > 0:
            in_specs += [wspec((n_hidden, nh_p, nh_p)),                     # wh
                         wspec((n_hidden, 1, nh_p))]                        # bh
            args += [wh, bh]
        in_specs += [wspec((nh_p, in_p)),                                   # wo
                     wspec((1, in_p))]                                      # bo
        args += [wo, bo]

        out_specs = pl.BlockSpec((TM, in_p), lambda i: (i, 0), memory_space=vmem)

        return pl.pallas_call(
            kernel,
            grid=grid,
            in_specs=in_specs,
            out_specs=out_specs,
            out_shape=jax.ShapeDtypeStruct((padded_B, in_p), jnp.float32),
            compiler_params=pltpu.CompilerParams(
                dimension_semantics=("parallel",),  # batch tiles shard over v7x's 2 TCs
                vmem_limit_bytes=vmem_limit,
            ),
            cost_estimate=cost,
        )(*args)

    try:
        out2d = run(single_buffer_weights=True)
    except Exception:
        # Pallas build without pipeline_mode / Buffered(1) support on the
        # top-level TPU pipeline: fall back to default double-buffered weights
        # (the previously verified-clean configuration).
        out2d = run(single_buffer_weights=False)

    # Drop batch and feature padding, restore (B, seq_len, cat_input_dim) f32.
    return out2d[:B, :in_dim].reshape(B, seq_len, cat_input_dim)


def init_params(key, *, in_dim, nh, nlayers):
    """Deterministic init mirroring nn.Linear default (uniform +/- 1/sqrt(fan_in))."""
    ks = jax.random.split(key, 6)

    def lin_init(kw, kb, fan_in, fan_out):
        bound = 1.0 / math.sqrt(fan_in)
        w = jax.random.uniform(kw, (fan_in, fan_out), jnp.float32, -bound, bound)
        b = jax.random.uniform(kb, (1, fan_out), jnp.float32, -bound, bound)
        return w, b

    w1, b1 = lin_init(ks[0], ks[1], in_dim, nh)

    n_hidden = nlayers - 1
    if n_hidden > 0:
        kwh = jax.random.split(ks[2], n_hidden)
        kbh = jax.random.split(ks[3], n_hidden)
        whs, bhs = [], []
        for i in range(n_hidden):
            w, b = lin_init(kwh[i], kbh[i], nh, nh)
            whs.append(w)
            bhs.append(b)
        wh = jnp.stack(whs)                 # (nlayers-1, nh, nh)
        bh = jnp.stack(bhs)                 # (nlayers-1, 1, nh)
    else:
        wh = jnp.zeros((0, nh, nh), jnp.float32)
        bh = jnp.zeros((0, 1, nh), jnp.float32)

    wo, bo = lin_init(ks[4], ks[5], nh, in_dim)

    return {"w1": w1, "b1": b1, "wh": wh, "bh": bh, "wo": wo, "bo": bo}


def reference_forward(src, params, *, seq_len, cat_input_dim, nlayers, action_tanh):
    """Pure-JAX f32 reference of the same MLP (dropout = identity)."""
    B = src.shape[0]
    in_dim = cat_input_dim * seq_len
    h = src.reshape(B, in_dim).astype(jnp.float32) @ params["w1"] + params["b1"]
    for l in range(nlayers - 1):
        h = jnp.maximum(h, 0.0) @ params["wh"][l] + params["bh"][l]
    out = jnp.maximum(h, 0.0) @ params["wo"] + params["bo"]
    if action_tanh:
        out = jnp.tanh(out)
    return out.reshape(B, seq_len, cat_input_dim)


if __name__ == "__main__":
    # Small shapes consistent with the module.
    B = 2
    seq_len = 8
    cat_input_dim = 4
    nlayers = 2
    feedforward_nhid = 32
    action_tanh = True
    in_dim = cat_input_dim * seq_len  # 32

    key = jax.random.PRNGKey(0)
    k_x, k_p = jax.random.split(key)

    src = jax.random.normal(k_x, (B, seq_len, cat_input_dim), jnp.float32)
    params = init_params(k_p, in_dim=in_dim, nh=feedforward_nhid, nlayers=nlayers)

    out = flexi_nn_forward(src, params, seq_len=seq_len,
                           cat_input_dim=cat_input_dim, nlayers=nlayers,
                           action_tanh=action_tanh)
    out = jax.block_until_ready(out)

    ref = reference_forward(src, params, seq_len=seq_len,
                            cat_input_dim=cat_input_dim, nlayers=nlayers,
                            action_tanh=action_tanh)
    assert out.shape == (B, seq_len, cat_input_dim)
    # bf16 matmul inputs with f32 accumulation -> loose tolerance vs f32 ref.
    assert jnp.allclose(out, ref, atol=2e-2, rtol=2e-2), "nlayers=2 mismatch"

    # Also exercise the nlayers == 1 path (zero hidden layers gated out).
    params1 = init_params(k_p, in_dim=in_dim, nh=feedforward_nhid, nlayers=1)
    out1 = jax.block_until_ready(
        flexi_nn_forward(src, params1, seq_len=seq_len,
                         cat_input_dim=cat_input_dim, nlayers=1,
                         action_tanh=action_tanh))
    ref1 = reference_forward(src, params1, seq_len=seq_len,
                             cat_input_dim=cat_input_dim, nlayers=1,
                             action_tanh=action_tanh)
    assert jnp.allclose(out1, ref1, atol=2e-2, rtol=2e-2), "nlayers=1 mismatch"

    # Exercise a multi-tile batch (B > 8 -> >= 2 batch tiles, padding-minimal TM).
    B2 = 20
    src2 = jax.random.normal(jax.random.PRNGKey(1), (B2, seq_len, cat_input_dim),
                             jnp.float32)
    out2 = jax.block_until_ready(
        flexi_nn_forward(src2, params, seq_len=seq_len,
                         cat_input_dim=cat_input_dim, nlayers=nlayers,
                         action_tanh=action_tanh))
    ref2 = reference_forward(src2, params, seq_len=seq_len,
                             cat_input_dim=cat_input_dim, nlayers=nlayers,
                             action_tanh=action_tanh)
    assert jnp.allclose(out2, ref2, atol=2e-2, rtol=2e-2), "multi-tile mismatch"

    print("KERNEL_OK")
</pallas_src>

<mosaic_0001>
module attributes {stable_mosaic.version = 11 : i64} {
  func.func @_mlp_kernel(%arg0: i32, %arg1: memref<8x256xbf16, #tpu.memory_space<vmem>>, %arg2: memref<256x256xbf16, #tpu.memory_space<vmem>>, %arg3: memref<1x256xf32, #tpu.memory_space<vmem>>, %arg4: memref<1x256x256xbf16, #tpu.memory_space<vmem>>, %arg5: memref<1x1x256xf32, #tpu.memory_space<vmem>>, %arg6: memref<256x256xbf16, #tpu.memory_space<vmem>>, %arg7: memref<1x256xf32, #tpu.memory_space<vmem>>, %arg8: memref<8x256xf32, #tpu.memory_space<vmem>>) attributes {dimension_semantics = [#tpu.dimension_semantics<parallel>], iteration_bounds = array<i64: 1>, scalar_prefetch = 0 : i64, scratch_operands = 0 : i64, tpu.core_type = #tpu.core_type<tc>, window_params = [{transform_indices = @transform_0, window_bounds = array<i64: 8, 256>}, {pipeline_mode = #tpu.pipeline_mode<synchronous>, transform_indices = @transform_1, window_bounds = array<i64: 256, 256>}, {pipeline_mode = #tpu.pipeline_mode<synchronous>, transform_indices = @transform_2, window_bounds = array<i64: 1, 256>}, {pipeline_mode = #tpu.pipeline_mode<synchronous>, transform_indices = @transform_3, window_bounds = array<i64: 1, 256, 256>}, {pipeline_mode = #tpu.pipeline_mode<synchronous>, transform_indices = @transform_4, window_bounds = array<i64: 1, 1, 256>}, {pipeline_mode = #tpu.pipeline_mode<synchronous>, transform_indices = @transform_5, window_bounds = array<i64: 256, 256>}, {pipeline_mode = #tpu.pipeline_mode<synchronous>, transform_indices = @transform_6, window_bounds = array<i64: 1, 256>}, {transform_indices = @transform_7, window_bounds = array<i64: 8, 256>}]} {
    %c0 = arith.constant 0 : index
    %c0_0 = arith.constant 0 : index
    %0 = vector.load %arg1[%c0, %c0_0] : memref<8x256xbf16, #tpu.memory_space<vmem>>, vector<8x256xbf16>
    %c0_1 = arith.constant 0 : index
    %c0_2 = arith.constant 0 : index
    %1 = vector.load %arg2[%c0_1, %c0_2] : memref<256x256xbf16, #tpu.memory_space<vmem>>, vector<256x256xbf16>
    %cst = arith.constant dense<0.000000e+00> : vector<8x256xf32>
    %2 = tpu.matmul %0, %1, %cst {dimension_numbers = #tpu.dot_dimension_numbers<[1], [0], [0], [1], [0, 0, 1, 1], [], []>} : vector<8x256xbf16>, vector<256x256xbf16>, vector<8x256xf32> -> vector<8x256xf32>
    %c0_3 = arith.constant 0 : index
    %c0_4 = arith.constant 0 : index
    %3 = vector.load %arg3[%c0_3, %c0_4] : memref<1x256xf32, #tpu.memory_space<vmem>>, vector<1x256xf32>
    %4 = vector.broadcast %3 : vector<1x256xf32> to vector<8x256xf32>
    %5 = arith.addf %2, %4 : vector<8x256xf32>
    %cst_5 = arith.constant 0.000000e+00 : f32
    %6 = vector.broadcast %cst_5 : f32 to vector<8x256xf32>
    %7 = arith.maximumf %5, %6 : vector<8x256xf32>
    %8 = arith.truncf %7 : vector<8x256xf32> to vector<8x256xbf16>
    %c0_6 = arith.constant 0 : index
    %c0_7 = arith.constant 0 : index
    %c0_8 = arith.constant 0 : index
    %9 = vector.load %arg4[%c0_6, %c0_7, %c0_8] : memref<1x256x256xbf16, #tpu.memory_space<vmem>>, vector<1x256x256xbf16>
    %10 = vector.shape_cast %9 : vector<1x256x256xbf16> to vector<256x256xbf16>
    %cst_9 = arith.constant dense<0.000000e+00> : vector<8x256xf32>
    %11 = tpu.matmul %8, %10, %cst_9 {dimension_numbers = #tpu.dot_dimension_numbers<[1], [0], [0], [1], [0, 0, 1, 1], [], []>} : vector<8x256xbf16>, vector<256x256xbf16>, vector<8x256xf32> -> vector<8x256xf32>
    %c0_10 = arith.constant 0 : index
    %c0_11 = arith.constant 0 : index
    %c0_12 = arith.constant 0 : index
    %12 = vector.load %arg5[%c0_10, %c0_11, %c0_12] : memref<1x1x256xf32, #tpu.memory_space<vmem>>, vector<1x1x256xf32>
    %13 = vector.shape_cast %12 : vector<1x1x256xf32> to vector<1x256xf32>
    %14 = vector.broadcast %13 : vector<1x256xf32> to vector<8x256xf32>
    %15 = arith.addf %11, %14 : vector<8x256xf32>
    %cst_13 = arith.constant 0.000000e+00 : f32
    %16 = vector.broadcast %cst_13 : f32 to vector<8x256xf32>
    %17 = arith.maximumf %15, %16 : vector<8x256xf32>
    %18 = arith.truncf %17 : vector<8x256xf32> to vector<8x256xbf16>
    %c0_14 = arith.constant 0 : index
    %c0_15 = arith.constant 0 : index
    %19 = vector.load %arg6[%c0_14, %c0_15] : memref<256x256xbf16, #tpu.memory_space<vmem>>, vector<256x256xbf16>
    %cst_16 = arith.constant dense<0.000000e+00> : vector<8x256xf32>
    %20 = tpu.matmul %18, %19, %cst_16 {dimension_numbers = #tpu.dot_dimension_numbers<[1], [0], [0], [1], [0, 0, 1, 1], [], []>} : vector<8x256xbf16>, vector<256x256xbf16>, vector<8x256xf32> -> vector<8x256xf32>
    %c0_17 = arith.constant 0 : index
    %c0_18 = arith.constant 0 : index
    %21 = vector.load %arg7[%c0_17, %c0_18] : memref<1x256xf32, #tpu.memory_space<vmem>>, vector<1x256xf32>
    %22 = vector.broadcast %21 : vector<1x256xf32> to vector<8x256xf32>
    %23 = arith.addf %20, %22 : vector<8x256xf32>
    %24 = math.tanh %23 : vector<8x256xf32>
    %c0_19 = arith.constant 0 : index
    %c0_20 = arith.constant 0 : index
    %25 = vector.load %arg8[%c0_19, %c0_20] : memref<8x256xf32, #tpu.memory_space<vmem>>, vector<8x256xf32>
    tpu.vector_store %arg8[%c0_19, %c0_20], %24 {strides = array<i32>} : memref<8x256xf32, #tpu.memory_space<vmem>>, vector<8x256xf32>,
    return
  }
  func.func @transform_0(%arg0: i32) -> (i32, i32) {
    %c0_i32 = arith.constant 0 : i32
    %c0_i32_0 = arith.constant 0 : i32
    return %arg0, %c0_i32 : i32, i32
  }
  func.func @transform_1(%arg0: i32) -> (i32, i32) {
    %c0_i32 = arith.constant 0 : i32
    %c0_i32_0 = arith.constant 0 : i32
    %c0_i32_1 = arith.constant 0 : i32
    return %c0_i32, %c0_i32_0 : i32, i32
  }
  func.func @transform_2(%arg0: i32) -> (i32, i32) {
    %c0_i32 = arith.constant 0 : i32
    %c0_i32_0 = arith.constant 0 : i32
    %c0_i32_1 = arith.constant 0 : i32
    return %c0_i32, %c0_i32_0 : i32, i32
  }
  func.func @transform_3(%arg0: i32) -> (i32, i32, i32) {
    %c0_i32 = arith.constant 0 : i32
    %c0_i32_0 = arith.constant 0 : i32
    %c0_i32_1 = arith.constant 0 : i32
    %c0_i32_2 = arith.constant 0 : i32
    return %c0_i32, %c0_i32_0, %c0_i32_1 : i32, i32, i32
  }
  func.func @transform_4(%arg0: i32) -> (i32, i32, i32) {
    %c0_i32 = arith.constant 0 : i32
    %c0_i32_0 = arith.constant 0 : i32
    %c0_i32_1 = arith.constant 0 : i32
    %c0_i32_2 = arith.constant 0 : i32
    return %c0_i32, %c0_i32_0, %c0_i32_1 : i32, i32, i32
  }
  func.func @transform_5(%arg0: i32) -> (i32, i32) {
    %c0_i32 = arith.constant 0 : i32
    %c0_i32_0 = arith.constant 0 : i32
    %c0_i32_1 = arith.constant 0 : i32
    return %c0_i32, %c0_i32_0 : i32, i32
  }
  func.func @transform_6(%arg0: i32) -> (i32, i32) {
    %c0_i32 = arith.constant 0 : i32
    %c0_i32_0 = arith.constant 0 : i32
    %c0_i32_1 = arith.constant 0 : i32
    return %c0_i32, %c0_i32_0 : i32, i32
  }
  func.func @transform_7(%arg0: i32) -> (i32, i32) {
    %c0_i32 = arith.constant 0 : i32
    %c0_i32_0 = arith.constant 0 : i32
    return %arg0, %c0_i32 : i32, i32
  }
}

module attributes {stable_mosaic.version = 11 : i64} {
  func.func @_mlp_kernel(%arg0: i32, %arg1: memref<8x256xbf16, #tpu.memory_space<vmem>>, %arg2: memref<256x256xbf16, #tpu.memory_space<vmem>>, %arg3: memref<1x256xf32, #tpu.memory_space<vmem>>, %arg4: memref<1x256x256xbf16, #tpu.memory_space<vmem>>, %arg5: memref<1x1x256xf32, #tpu.memory_space<vmem>>, %arg6: memref<256x256xbf16, #tpu.memory_space<vmem>>, %arg7: memref<1x256xf32, #tpu.memory_space<vmem>>, %arg8: memref<8x256xf32, #tpu.memory_space<vmem>>) attributes {dimension_semantics = [#tpu.dimension_semantics<parallel>], iteration_bounds = array<i64: 1>, scalar_prefetch = 0 : i64, scratch_operands = 0 : i64, tpu.core_type = #tpu.core_type<tc>, window_params = [{transform_indices = @transform_0, window_bounds = array<i64: 8, 256>}, {pipeline_mode = #tpu.pipeline_mode<synchronous>, transform_indices = @transform_1, window_bounds = array<i64: 256, 256>}, {pipeline_mode = #tpu.pipeline_mode<synchronous>, transform_indices = @transform_2, window_bounds = array<i64: 1, 256>}, {pipeline_mode = #tpu.pipeline_mode<synchronous>, transform_indices = @transform_3, window_bounds = array<i64: 1, 256, 256>}, {pipeline_mode = #tpu.pipeline_mode<synchronous>, transform_indices = @transform_4, window_bounds = array<i64: 1, 1, 256>}, {pipeline_mode = #tpu.pipeline_mode<synchronous>, transform_indices = @transform_5, window_bounds = array<i64: 256, 256>}, {pipeline_mode = #tpu.pipeline_mode<synchronous>, transform_indices = @transform_6, window_bounds = array<i64: 1, 256>}, {transform_indices = @transform_7, window_bounds = array<i64: 8, 256>}]} {
    %c0 = arith.constant 0 : index
    %c0_0 = arith.constant 0 : index
    %0 = vector.load %arg1[%c0, %c0_0] : memref<8x256xbf16, #tpu.memory_space<vmem>>, vector<8x256xbf16>
    %c0_1 = arith.constant 0 : index
    %c0_2 = arith.constant 0 : index
    %1 = vector.load %arg2[%c0_1, %c0_2] : memref<256x256xbf16, #tpu.memory_space<vmem>>, vector<256x256xbf16>
    %cst = arith.constant dense<0.000000e+00> : vector<8x256xf32>
    %2 = tpu.matmul %0, %1, %cst {dimension_numbers = #tpu.dot_dimension_numbers<[1], [0], [0], [1], [0, 0, 1, 1], [], []>} : vector<8x256xbf16>, vector<256x256xbf16>, vector<8x256xf32> -> vector<8x256xf32>
    %c0_3 = arith.constant 0 : index
    %c0_4 = arith.constant 0 : index
    %3 = vector.load %arg3[%c0_3, %c0_4] : memref<1x256xf32, #tpu.memory_space<vmem>>, vector<1x256xf32>
    %4 = vector.broadcast %3 : vector<1x256xf32> to vector<8x256xf32>
    %5 = arith.addf %2, %4 : vector<8x256xf32>
    %cst_5 = arith.constant 0.000000e+00 : f32
    %6 = vector.broadcast %cst_5 : f32 to vector<8x256xf32>
    %7 = arith.maximumf %5, %6 : vector<8x256xf32>
    %8 = arith.truncf %7 : vector<8x256xf32> to vector<8x256xbf16>
    %c0_6 = arith.constant 0 : index
    %c0_7 = arith.constant 0 : index
    %c0_8 = arith.constant 0 : index
    %9 = vector.load %arg4[%c0_6, %c0_7, %c0_8] : memref<1x256x256xbf16, #tpu.memory_space<vmem>>, vector<1x256x256xbf16>
    %10 = vector.shape_cast %9 : vector<1x256x256xbf16> to vector<256x256xbf16>
    %cst_9 = arith.constant dense<0.000000e+00> : vector<8x256xf32>
    %11 = tpu.matmul %8, %10, %cst_9 {dimension_numbers = #tpu.dot_dimension_numbers<[1], [0], [0], [1], [0, 0, 1, 1], [], []>} : vector<8x256xbf16>, vector<256x256xbf16>, vector<8x256xf32> -> vector<8x256xf32>
    %c0_10 = arith.constant 0 : index
    %c0_11 = arith.constant 0 : index
    %c0_12 = arith.constant 0 : index
    %12 = vector.load %arg5[%c0_10, %c0_11, %c0_12] : memref<1x1x256xf32, #tpu.memory_space<vmem>>, vector<1x1x256xf32>
    %13 = vector.shape_cast %12 : vector<1x1x256xf32> to vector<1x256xf32>
    %14 = vector.broadcast %13 : vector<1x256xf32> to vector<8x256xf32>
    %15 = arith.addf %11, %14 : vector<8x256xf32>
    %cst_13 = arith.constant 0.000000e+00 : f32
    %16 = vector.broadcast %cst_13 : f32 to vector<8x256xf32>
    %17 = arith.maximumf %15, %16 : vector<8x256xf32>
    %18 = arith.truncf %17 : vector<8x256xf32> to vector<8x256xbf16>
    %c0_14 = arith.constant 0 : index
    %c0_15 = arith.constant 0 : index
    %19 = vector.load %arg6[%c0_14, %c0_15] : memref<256x256xbf16, #tpu.memory_space<vmem>>, vector<256x256xbf16>
    %cst_16 = arith.constant dense<0.000000e+00> : vector<8x256xf32>
    %20 = tpu.matmul %18, %19, %cst_16 {dimension_numbers = #tpu.dot_dimension_numbers<[1], [0], [0], [1], [0, 0, 1, 1], [], []>} : vector<8x256xbf16>, vector<256x256xbf16>, vector<8x256xf32> -> vector<8x256xf32>
    %c0_17 = arith.constant 0 : index
    %c0_18 = arith.constant 0 : index
    %21 = vector.load %arg7[%c0_17, %c0_18] : memref<1x256xf32, #tpu.memory_space<vmem>>, vector<1x256xf32>
    %22 = vector.broadcast %21 : vector<1x256xf32> to vector<8x256xf32>
    %23 = arith.addf %20, %22 : vector<8x256xf32>
    %24 = math.tanh %23 : vector<8x256xf32>
    %c0_19 = arith.constant 0 : index
    %c0_20 = arith.constant 0 : index
    %25 = vector.load %arg8[%c0_19, %c0_20] : memref<8x256xf32, #tpu.memory_space<vmem>>, vector<8x256xf32>
    tpu.vector_store %arg8[%c0_19, %c0_20], %24 {strides = array<i32>} : memref<8x256xf32, #tpu.memory_space<vmem>>, vector<8x256xf32>,
    return
  }
  func.func @transform_0(%arg0: i32) -> (i32, i32) {
    %c0_i32 = arith.constant 0 : i32
    %c0_i32_0 = arith.constant 0 : i32
    return %arg0, %c0_i32 : i32, i32
  }
  func.func @transform_1(%arg0: i32) -> (i32, i32) {
    %c0_i32 = arith.constant 0 : i32
    %c0_i32_0 = arith.constant 0 : i32
    %c0_i32_1 = arith.constant 0 : i32
    return %c0_i32, %c0_i32_0 : i32, i32
  }
  func.func @transform_2(%arg0: i32) -> (i32, i32) {
    %c0_i32 = arith.constant 0 : i32
    %c0_i32_0 = arith.constant 0 : i32
    %c0_i32_1 = arith.constant 0 : i32
    return %c0_i32, %c0_i32_0 : i32, i32
  }
  func.func @transform_3(%arg0: i32) -> (i32, i32, i32) {
    %c0_i32 = arith.constant 0 : i32
    %c0_i32_0 = arith.constant 0 : i32
    %c0_i32_1 = arith.constant 0 : i32
    %c0_i32_2 = arith.constant 0 : i32
    return %c0_i32, %c0_i32_0, %c0_i32_1 : i32, i32, i32
  }
  func.func @transform_4(%arg0: i32) -> (i32, i32, i32) {
    %c0_i32 = arith.constant 0 : i32
    %c0_i32_0 = arith.constant 0 : i32
    %c0_i32_1 = arith.constant 0 : i32
    %c0_i32_2 = arith.constant 0 : i32
    return %c0_i32, %c0_i32_0, %c0_i32_1 : i32, i32, i32
  }
  func.func @transform_5(%arg0: i32) -> (i32, i32) {
    %c0_i32 = arith.constant 0 : i32
    %c0_i32_0 = arith.constant 0 : i32
    %c0_i32_1 = arith.constant 0 : i32
    return %c0_i32, %c0_i32_0 : i32, i32
  }
  func.func @transform_6(%arg0: i32) -> (i32, i32) {
    %c0_i32 = arith.constant 0 : i32
    %c0_i32_0 = arith.constant 0 : i32
    %c0_i32_1 = arith.constant 0 : i32
    return %c0_i32, %c0_i32_0 : i32, i32
  }
  func.func @transform_7(%arg0: i32) -> (i32, i32) {
    %c0_i32 = arith.constant 0 : i32
    %c0_i32_0 = arith.constant 0 : i32
    return %arg0, %c0_i32 : i32, i32
  }
}

</mosaic_0001>

<llo_original>
// kernel: tpu_custom_call.1
$region0: #{tpu_custom_call.1}
  #allocation0 [shape = 'u32[]', space=smem, size = 0x4, offset = 0x4, fixed_abs, tag = 'smem constant byte address 0x4 - core index']
  #allocation1 [shape = 'u32[144,128]{1,0:T(1,128)}', space=vmem, size = 0x12000, scoped, tag = 'internal scratch']
  %s0 = inlined_call_operand.hbm [shape: bf16[8,256], index: 0, kind: input, shape index: {}]
  %s1 = inlined_call_operand.hbm [shape: bf16[256,256], index: 1, kind: input, shape index: {}]
  %s2 = inlined_call_operand.vmem [shape: f32[1,256], index: 2, kind: input, shape index: {}]
  %s3 = inlined_call_operand.hbm [shape: bf16[1,256,256], index: 3, kind: input, shape index: {}]
  %s4 = inlined_call_operand.vmem [shape: f32[1,1,256], index: 4, kind: input, shape index: {}]
  %s5 = inlined_call_operand.hbm [shape: bf16[256,256], index: 5, kind: input, shape index: {}]
  %s6 = inlined_call_operand.vmem [shape: f32[1,256], index: 6, kind: input, shape index: {}]
  %s7 = inlined_call_operand.hbm [shape: f32[8,256], index: 7, kind: output, shape index: {}]
  %s8 = sld [smem:[#allocation0]]
  $region54: #{tpu_custom_call.1} parent=0
    _
  %s10 = ssub.s32 1, %s8
  %s11 = scalar_select 0, %s10, %s8
  $region1: #{tpu_custom_call.1} parent=0
    #allocation2 [shape = 'u8[4096]{0}', space=vmem, size = 0x1000, scoped, tag = 'input window, operand 0, single buffered']
    #allocation3 [shape = 's32[1]{0}', space=sflag, size = 0x4, scoped, tag = 'scoped memory for tpu_custom_call.1']
    #allocation4 [shape = 's32[1]{0}', space=sflag, size = 0x4, scoped, tag = 'scoped memory for tpu_custom_call.1']
    #allocation5 [shape = 'u8[131072]{0}', space=vmem, size = 0x20000, scoped, tag = 'input window, operand 1, single buffered']
    #allocation6 [shape = 's32[1]{0}', space=sflag, size = 0x4, scoped, tag = 'scoped memory for tpu_custom_call.1']
    #allocation7 [shape = 'u8[131072]{0}', space=vmem, size = 0x20000, scoped, tag = 'input window, operand 3, single buffered']
    #allocation8 [shape = 'u8[131072]{0}', space=vmem, size = 0x20000, scoped, tag = 'input window, operand 5, single buffered']
    #allocation9 [shape = 's32[1]{0}', space=sflag, size = 0x4, scoped, tag = 'scoped memory for tpu_custom_call.1']
    #allocation10 [shape = 'u8[8192]{0}', space=vmem, size = 0x2000, scoped, tag = 'output window, operand 0, single buffered']
    %12 = vsyncpa [#allocation3], 0
    %13 = vsyncpa [#allocation6], 0
    %14 = vsyncpa [#allocation9], 0
    %15 = vsyncpa [#allocation4], 0
    // Predicated region
    $region2: #{tpu_custom_call.1} parent=1 // pred_check
      _
    $region3: #{tpu_custom_call.1} parent=1 // pred_check_branch
      %17 = sbr.rel (0) target = $region5
    $region4: #{tpu_custom_call.1} parent=1 // pred_region
      %s19 = ssub.s32 128, 128
      %20 = vsyncadd [#allocation3], %s19
      %s22 = sshll.u32 [#allocation2], 4
      %s23 = int_to_ptr.vmem [resolvable:$true] %s22
      %25 = dma.hbm_to_vmem [thread:$0]  %s0, 128, %s23, [#allocation3]
    $region5: #{tpu_custom_call.1} parent=1 // pred_fallthru
      _
    // Predicated region
    $region6: #{tpu_custom_call.1} parent=1 // pred_check
      _
    $region7: #{tpu_custom_call.1} parent=1 // pred_check_branch
      %27 = sbr.rel (0) target = $region9
    $region8: #{tpu_custom_call.1} parent=1 // pred_region
      %s29 = ssub.s32 4096, 4096
      %30 = vsyncadd [#allocation6], %s29
      %s31 = sshll.u32 [#allocation5], 4
      %s32 = int_to_ptr.vmem [resolvable:$true] %s31
      %37 = dma.hbm_to_vmem [thread:$0]  %s1, 4096, %s32, [#allocation6], 128, 128, 8
    $region9: #{tpu_custom_call.1} parent=1 // pred_fallthru
      _
    // Predicated region
    $region10: #{tpu_custom_call.1} parent=1 // pred_check
      _
    $region11: #{tpu_custom_call.1} parent=1 // pred_check_branch
      %39 = sbr.rel (0) target = $region13
    $region12: #{tpu_custom_call.1} parent=1 // pred_region
      _
    $region13: #{tpu_custom_call.1} parent=1 // pred_fallthru
      _
    // Predicated region
    $region14: #{tpu_custom_call.1} parent=1 // pred_check
      _
    $region15: #{tpu_custom_call.1} parent=1 // pred_check_branch
      %41 = sbr.rel (0) target = $region17
    $region16: #{tpu_custom_call.1} parent=1 // pred_region
      %s43 = ssub.s32 4096, 4096
      %44 = vsyncadd [#allocation6], %s43
      %s45 = sshll.u32 [#allocation7], 4
      %s46 = int_to_ptr.vmem [resolvable:$true] %s45
      %51 = dma.hbm_to_vmem [thread:$0]  %s3, 4096, %s46, [#allocation6], 128, 128, 8
    $region17: #{tpu_custom_call.1} parent=1 // pred_fallthru
      _
    // Predicated region
    $region18: #{tpu_custom_call.1} parent=1 // pred_check
      _
    $region19: #{tpu_custom_call.1} parent=1 // pred_check_branch
      %53 = sbr.rel (0) target = $region21
    $region20: #{tpu_custom_call.1} parent=1 // pred_region
      _
    $region21: #{tpu_custom_call.1} parent=1 // pred_fallthru
      _
    // Predicated region
    $region22: #{tpu_custom_call.1} parent=1 // pred_check
      _
    $region23: #{tpu_custom_call.1} parent=1 // pred_check_branch
      %55 = sbr.rel (0) target = $region25
    $region24: #{tpu_custom_call.1} parent=1 // pred_region
      %s57 = ssub.s32 4096, 4096
      %58 = vsyncadd [#allocation9], %s57
      %s59 = sshll.u32 [#allocation8], 4
      %s60 = int_to_ptr.vmem [resolvable:$true] %s59
      %65 = dma.hbm_to_vmem [thread:$0]  %s5, 4096, %s60, [#allocation9], 128, 128, 8
    $region25: #{tpu_custom_call.1} parent=1 // pred_fallthru
      _
    // Predicated region
    $region26: #{tpu_custom_call.1} parent=1 // pred_check
      _
    $region27: #{tpu_custom_call.1} parent=1 // pred_check_branch
      %67 = sbr.rel (0) target = $region29
    $region28: #{tpu_custom_call.1} parent=1 // pred_region
      _
    $region29: #{tpu_custom_call.1} parent=1 // pred_fallthru
      _
    // Predicated region
    $region30: #{tpu_custom_call.1} parent=1 // pred_check
      _
    $region31: #{tpu_custom_call.1} parent=1 // pred_check_branch
      %69 = sbr.rel (0) target = $region33
    $region32: #{tpu_custom_call.1} parent=1 // pred_region
      %70 = dma.done [#allocation3], 128
    $region33: #{tpu_custom_call.1} parent=1 // pred_fallthru
      _
    // Predicated region
    $region34: #{tpu_custom_call.1} parent=1 // pred_check
      _
    $region35: #{tpu_custom_call.1} parent=1 // pred_check_branch
      %72 = sbr.rel (0) target = $region37
    $region36: #{tpu_custom_call.1} parent=1 // pred_region
      %73 = dma.done [#allocation6], 4096
    $region37: #{tpu_custom_call.1} parent=1 // pred_fallthru
      _
    // Predicated region
    $region38: #{tpu_custom_call.1} parent=1 // pred_check
      _
    $region39: #{tpu_custom_call.1} parent=1 // pred_check_branch
      %75 = sbr.rel (0) target = $region41
    $region40: #{tpu_custom_call.1} parent=1 // pred_region
      %76 = dma.done [#allocation6], 4096
    $region41: #{tpu_custom_call.1} parent=1 // pred_fallthru
      _
    // Predicated region
    $region42: #{tpu_custom_call.1} parent=1 // pred_check
      _
    $region43: #{tpu_custom_call.1} parent=1 // pred_check_branch
      %78 = sbr.rel (0) target = $region45
    $region44: #{tpu_custom_call.1} parent=1 // pred_region
      %79 = dma.done [#allocation9], 4096
    $region45: #{tpu_custom_call.1} parent=1 // pred_fallthru
      _
    %v80 = vld [vmem:[#allocation2] sm:$0xff]
    %v81 = vld [vmem:[#allocation5] sm:$0xff]
    %v82 = vld [vmem:[#allocation5 + $0x8] sm:$0xff]
    %v83 = vld [vmem:[#allocation5 + $0x10] sm:$0xff]
    %v84 = vld [vmem:[#allocation5 + $0x18] sm:$0xff]
    %v85 = vld [vmem:[#allocation5 + $0x20] sm:$0xff]
    %v86 = vld [vmem:[#allocation5 + $0x28] sm:$0xff]
    %v87 = vld [vmem:[#allocation5 + $0x30] sm:$0xff]
    %v88 = vld [vmem:[#allocation5 + $0x38] sm:$0xff]
    %v89 = vld [vmem:[#allocation5 + $0x40] sm:$0xff]
    %v90 = vld [vmem:[#allocation5 + $0x48] sm:$0xff]
    %v91 = vld [vmem:[#allocation5 + $0x50] sm:$0xff]
    %v92 = vld [vmem:[#allocation5 + $0x58] sm:$0xff]
    %v93 = vld [vmem:[#allocation5 + $0x60] sm:$0xff]
    %v94 = vld [vmem:[#allocation5 + $0x68] sm:$0xff]
    %v95 = vld [vmem:[#allocation5 + $0x70] sm:$0xff]
    %v96 = vld [vmem:[#allocation5 + $0x78] sm:$0xff]
    %v97 = vld [vmem:[#allocation5 + $0x80] sm:$0xff]
    %v98 = vld [vmem:[#allocation5 + $0x88] sm:$0xff]
    %v99 = vld [vmem:[#allocation5 + $0x90] sm:$0xff]
    %v100 = vld [vmem:[#allocation5 + $0x98] sm:$0xff]
    %v101 = vld [vmem:[#allocation5 + $0xa0] sm:$0xff]
    %v102 = vld [vmem:[#allocation5 + $0xa8] sm:$0xff]
    %v103 = vld [vmem:[#allocation5 + $0xb0] sm:$0xff]
    %v104 = vld [vmem:[#allocation5 + $0xb8] sm:$0xff]
    %v105 = vld [vmem:[#allocation5 + $0xc0] sm:$0xff]
    %v106 = vld [vmem:[#allocation5 + $0xc8] sm:$0xff]
    %v107 = vld [vmem:[#allocation5 + $0xd0] sm:$0xff]
    %v108 = vld [vmem:[#allocation5 + $0xd8] sm:$0xff]
    %v109 = vld [vmem:[#allocation5 + $0xe0] sm:$0xff]
    %v110 = vld [vmem:[#allocation5 + $0xe8] sm:$0xff]
    %v111 = vld [vmem:[#allocation5 + $0xf0] sm:$0xff]
    %v112 = vld [vmem:[#allocation5 + $0xf8] sm:$0xff]
    %v113 = vld [vmem:[%s2] sm:$0x3]
    %v115 = vlaneseq
    %v116 = vshrl.u32 %v115, 7
    %v117 = vsub.s32 0, %v116
    %v118 = vrot.slane %v113, %v117
    %v119 = vlaneseq
    %v120 = vshrl.u32 %v119, 7
    %v121 = vsub.s32 1, %v120
    %v122 = vrot.slane %v113, %v121
    %v126 = vunpack.c.l.b16 %v80
    %v127 = vunpack.c.h.b16 %v80
    %v128 = vpack.c.b16 %v126, %v126
    %v129 = vpack.c.b16 %v127, %v127
    %v164 = vunpack.c.l.b16 %v81
    %v165 = vunpack.c.h.b16 %v81
    %v166 = vunpack.c.l.b16 %v82
    %v167 = vunpack.c.h.b16 %v82
    %v168 = vunpack.c.l.b16 %v83
    %v169 = vunpack.c.h.b16 %v83
    %v170 = vunpack.c.l.b16 %v84
    %v171 = vunpack.c.h.b16 %v84
    %v172 = vunpack.c.l.b16 %v85
    %v173 = vunpack.c.h.b16 %v85
    %v174 = vunpack.c.l.b16 %v86
    %v175 = vunpack.c.h.b16 %v86
    %v176 = vunpack.c.l.b16 %v87
    %v177 = vunpack.c.h.b16 %v87
    %v178 = vunpack.c.l.b16 %v88
    %v179 = vunpack.c.h.b16 %v88
    %v180 = vunpack.c.l.b16 %v89
    %v181 = vunpack.c.h.b16 %v89
    %v182 = vunpack.c.l.b16 %v90
    %v183 = vunpack.c.h.b16 %v90
    %v184 = vunpack.c.l.b16 %v91
    %v185 = vunpack.c.h.b16 %v91
    %v186 = vunpack.c.l.b16 %v92
    %v187 = vunpack.c.h.b16 %v92
    %v188 = vunpack.c.l.b16 %v93
    %v189 = vunpack.c.h.b16 %v93
    %v190 = vunpack.c.l.b16 %v94
    %v191 = vunpack.c.h.b16 %v94
    %v192 = vunpack.c.l.b16 %v95
    %v193 = vunpack.c.h.b16 %v95
    %v194 = vunpack.c.l.b16 %v96
    %v195 = vunpack.c.h.b16 %v96
    %v196 = vunpack.c.l.b16 %v97
    %v197 = vunpack.c.h.b16 %v97
    %v198 = vunpack.c.l.b16 %v98
    %v199 = vunpack.c.h.b16 %v98
    %v200 = vunpack.c.l.b16 %v99
    %v201 = vunpack.c.h.b16 %v99
    %v202 = vunpack.c.l.b16 %v100
    %v203 = vunpack.c.h.b16 %v100
    %v204 = vunpack.c.l.b16 %v101
    %v205 = vunpack.c.h.b16 %v101
    %v206 = vunpack.c.l.b16 %v102
    %v207 = vunpack.c.h.b16 %v102
    %v208 = vunpack.c.l.b16 %v103
    %v209 = vunpack.c.h.b16 %v103
    %v210 = vunpack.c.l.b16 %v104
    %v211 = vunpack.c.h.b16 %v104
    %v212 = vunpack.c.l.b16 %v105
    %v213 = vunpack.c.h.b16 %v105
    %v214 = vunpack.c.l.b16 %v106
    %v215 = vunpack.c.h.b16 %v106
    %v216 = vunpack.c.l.b16 %v107
    %v217 = vunpack.c.h.b16 %v107
    %v218 = vunpack.c.l.b16 %v108
    %v219 = vunpack.c.h.b16 %v108
    %v220 = vunpack.c.l.b16 %v109
    %v221 = vunpack.c.h.b16 %v109
    %v222 = vunpack.c.l.b16 %v110
    %v223 = vunpack.c.h.b16 %v110
    %v224 = vunpack.c.l.b16 %v111
    %v225 = vunpack.c.h.b16 %v111
    %v226 = vunpack.c.l.b16 %v112
    %v227 = vunpack.c.h.b16 %v112
    %v228 = vpack.c.b16 %v166, %v164
    %v229 = vpack.c.b16 %v167, %v165
    %v230 = vpack.c.b16 %v170, %v168
    %v231 = vpack.c.b16 %v171, %v169
    %v232 = vpack.c.b16 %v174, %v172
    %v233 = vpack.c.b16 %v175, %v173
    %v234 = vpack.c.b16 %v178, %v176
    %v235 = vpack.c.b16 %v179, %v177
    %v236 = vpack.c.b16 %v182, %v180
    %v237 = vpack.c.b16 %v183, %v181
    %v238 = vpack.c.b16 %v186, %v184
    %v239 = vpack.c.b16 %v187, %v185
    %v240 = vpack.c.b16 %v190, %v188
    %v241 = vpack.c.b16 %v191, %v189
    %v242 = vpack.c.b16 %v194, %v192
    %v243 = vpack.c.b16 %v195, %v193
    %v244 = vpack.c.b16 %v198, %v196
    %v245 = vpack.c.b16 %v199, %v197
    %v246 = vpack.c.b16 %v202, %v200
    %v247 = vpack.c.b16 %v203, %v201
    %v248 = vpack.c.b16 %v206, %v204
    %v249 = vpack.c.b16 %v207, %v205
    %v250 = vpack.c.b16 %v210, %v208
    %v251 = vpack.c.b16 %v211, %v209
    %v252 = vpack.c.b16 %v214, %v212
    %v253 = vpack.c.b16 %v215, %v213
    %v254 = vpack.c.b16 %v218, %v216
    %v255 = vpack.c.b16 %v219, %v217
    %v256 = vpack.c.b16 %v222, %v220
    %v257 = vpack.c.b16 %v223, %v221
    %v258 = vpack.c.b16 %v226, %v224
    %v259 = vpack.c.b16 %v227, %v225
    %292 = vmatprep.subr.bf16.mxu0 %v229
    %293 = vmatpush1.bf16.msra.mxu0 %v228
    %294 = vmatprep.subr.bf16.mxu0 %v231
    %295 = vmatpush1.bf16.msra.mxu0 %v230
    %296 = vmatprep.subr.bf16.mxu0 %v233
    %297 = vmatpush1.bf16.msra.mxu0 %v232
    %298 = vmatprep.subr.bf16.mxu0 %v235
    %299 = vmatpush1.bf16.msra.mxu0 %v234
    %300 = vmatprep.subr.bf16.mxu0 %v237
    %301 = vmatpush1.bf16.msra.mxu0 %v236
    %302 = vmatprep.subr.bf16.mxu0 %v239
    %303 = vmatpush1.bf16.msra.mxu0 %v238
    %304 = vmatprep.subr.bf16.mxu0 %v241
    %305 = vmatpush1.bf16.msra.mxu0 %v240
    %306 = vmatprep.subr.bf16.mxu0 %v243
    %307 = vmatpush1.bf16.msra.mxu0 %v242
    %308 = vmatprep.subr.bf16.mxu0 %v245
    %309 = vmatpush1.bf16.msra.mxu0 %v244
    %310 = vmatprep.subr.bf16.mxu0 %v247
    %311 = vmatpush1.bf16.msra.mxu0 %v246
    %312 = vmatprep.subr.bf16.mxu0 %v249
    %313 = vmatpush1.bf16.msra.mxu0 %v248
    %314 = vmatprep.subr.bf16.mxu0 %v251
    %315 = vmatpush1.bf16.msra.mxu0 %v250
    %316 = vmatprep.subr.bf16.mxu0 %v253
    %317 = vmatpush1.bf16.msra.mxu0 %v252
    %318 = vmatprep.subr.bf16.mxu0 %v255
    %319 = vmatpush1.bf16.msra.mxu0 %v254
    %320 = vmatprep.subr.bf16.mxu0 %v257
    %321 = vmatpush1.bf16.msra.mxu0 %v256
    %322 = vmatprep.subr.bf16.mxu0 %v259
    %323 = vmatpush1.bf16.msra.mxu0 %v258
    %324 = vmatprep.mubr.bf16.mxu0 %v129
    %325 = vmatmul.mubr.bf16.gmra.mrb[0].mxu0 %v128
    %v326 = vpop.f32.mrb[0].mxu0
    %v327 = vadd.f32 %v118, %v326
    %v328 = vpop.f32.mrb[0].mxu0
    %v329 = vadd.f32 %v122, %v328
    %v330 = vpop.f32.mrb[0].mxu0
    %v331 = vpop.f32.mrb[0].mxu0
    %332 = vdwg.mxu0
    %v333 = vmax.f32 %v327, 0.0
    %v334 = vmax.f32 %v329, 0.0
    %v335 = vpack.c.bf16 %v333, %v333
    %v336 = vpack.c.bf16 %v334, %v334
    %v337 = vld [vmem:[#allocation7] sm:$0xff]
    %v338 = vld [vmem:[#allocation7 + $0x8] sm:$0xff]
    %v339 = vld [vmem:[#allocation7 + $0x10] sm:$0xff]
    %v340 = vld [vmem:[#allocation7 + $0x18] sm:$0xff]
    %v341 = vld [vmem:[#allocation7 + $0x20] sm:$0xff]
    %v342 = vld [vmem:[#allocation7 + $0x28] sm:$0xff]
    %v343 = vld [vmem:[#allocation7 + $0x30] sm:$0xff]
    %v344 = vld [vmem:[#allocation7 + $0x38] sm:$0xff]
    %v345 = vld [vmem:[#allocation7 + $0x40] sm:$0xff]
    %v346 = vld [vmem:[#allocation7 + $0x48] sm:$0xff]
    %v347 = vld [vmem:[#allocation7 + $0x50] sm:$0xff]
    %v348 = vld [vmem:[#allocation7 + $0x58] sm:$0xff]
    %v349 = vld [vmem:[#allocation7 + $0x60] sm:$0xff]
    %v350 = vld [vmem:[#allocation7 + $0x68] sm:$0xff]
    %v351 = vld [vmem:[#allocation7 + $0x70] sm:$0xff]
    %v352 = vld [vmem:[#allocation7 + $0x78] sm:$0xff]
    %v353 = vld [vmem:[#allocation7 + $0x80] sm:$0xff]
    %v354 = vld [vmem:[#allocation7 + $0x88] sm:$0xff]
    %v355 = vld [vmem:[#allocation7 + $0x90] sm:$0xff]
    %v356 = vld [vmem:[#allocation7 + $0x98] sm:$0xff]
    %v357 = vld [vmem:[#allocation7 + $0xa0] sm:$0xff]
    %v358 = vld [vmem:[#allocation7 + $0xa8] sm:$0xff]
    %v359 = vld [vmem:[#allocation7 + $0xb0] sm:$0xff]
    %v360 = vld [vmem:[#allocation7 + $0xb8] sm:$0xff]
    %v361 = vld [vmem:[#allocation7 + $0xc0] sm:$0xff]
    %v362 = vld [vmem:[#allocation7 + $0xc8] sm:$0xff]
    %v363 = vld [vmem:[#allocation7 + $0xd0] sm:$0xff]
    %v364 = vld [vmem:[#allocation7 + $0xd8] sm:$0xff]
    %v365 = vld [vmem:[#allocation7 + $0xe0] sm:$0xff]
    %v366 = vld [vmem:[#allocation7 + $0xe8] sm:$0xff]
    %v367 = vld [vmem:[#allocation7 + $0xf0] sm:$0xff]
    %v368 = vld [vmem:[#allocation7 + $0xf8] sm:$0xff]
    %v369 = vld [vmem:[%s4] sm:$0x3]
    %v371 = vlaneseq
    %v372 = vshrl.u32 %v371, 7
    %v373 = vsub.s32 0, %v372
    %v374 = vrot.slane %v369, %v373
    %v375 = vlaneseq
    %v376 = vshrl.u32 %v375, 7
    %v377 = vsub.s32 1, %v376
    %v378 = vrot.slane %v369, %v377
    %v413 = vunpack.c.l.b16 %v337
    %v414 = vunpack.c.h.b16 %v337
    %v415 = vunpack.c.l.b16 %v338
    %v416 = vunpack.c.h.b16 %v338
    %v417 = vunpack.c.l.b16 %v339
    %v418 = vunpack.c.h.b16 %v339
    %v419 = vunpack.c.l.b16 %v340
    %v420 = vunpack.c.h.b16 %v340
    %v421 = vunpack.c.l.b16 %v341
    %v422 = vunpack.c.h.b16 %v341
    %v423 = vunpack.c.l.b16 %v342
    %v424 = vunpack.c.h.b16 %v342
    %v425 = vunpack.c.l.b16 %v343
    %v426 = vunpack.c.h.b16 %v343
    %v427 = vunpack.c.l.b16 %v344
    %v428 = vunpack.c.h.b16 %v344
    %v429 = vunpack.c.l.b16 %v345
    %v430 = vunpack.c.h.b16 %v345
    %v431 = vunpack.c.l.b16 %v346
    %v432 = vunpack.c.h.b16 %v346
    %v433 = vunpack.c.l.b16 %v347
    %v434 = vunpack.c.h.b16 %v347
    %v435 = vunpack.c.l.b16 %v348
    %v436 = vunpack.c.h.b16 %v348
    %v437 = vunpack.c.l.b16 %v349
    %v438 = vunpack.c.h.b16 %v349
    %v439 = vunpack.c.l.b16 %v350
    %v440 = vunpack.c.h.b16 %v350
    %v441 = vunpack.c.l.b16 %v351
    %v442 = vunpack.c.h.b16 %v351
    %v443 = vunpack.c.l.b16 %v352
    %v444 = vunpack.c.h.b16 %v352
    %v445 = vunpack.c.l.b16 %v353
    %v446 = vunpack.c.h.b16 %v353
    %v447 = vunpack.c.l.b16 %v354
    %v448 = vunpack.c.h.b16 %v354
    %v449 = vunpack.c.l.b16 %v355
    %v450 = vunpack.c.h.b16 %v355
    %v451 = vunpack.c.l.b16 %v356
    %v452 = vunpack.c.h.b16 %v356
    %v453 = vunpack.c.l.b16 %v357
    %v454 = vunpack.c.h.b16 %v357
    %v455 = vunpack.c.l.b16 %v358
    %v456 = vunpack.c.h.b16 %v358
    %v457 = vunpack.c.l.b16 %v359
    %v458 = vunpack.c.h.b16 %v359
    %v459 = vunpack.c.l.b16 %v360
    %v460 = vunpack.c.h.b16 %v360
    %v461 = vunpack.c.l.b16 %v361
    %v462 = vunpack.c.h.b16 %v361
    %v463 = vunpack.c.l.b16 %v362
    %v464 = vunpack.c.h.b16 %v362
    %v465 = vunpack.c.l.b16 %v363
    %v466 = vunpack.c.h.b16 %v363
    %v467 = vunpack.c.l.b16 %v364
    %v468 = vunpack.c.h.b16 %v364
    %v469 = vunpack.c.l.b16 %v365
    %v470 = vunpack.c.h.b16 %v365
    %v471 = vunpack.c.l.b16 %v366
    %v472 = vunpack.c.h.b16 %v366
    %v473 = vunpack.c.l.b16 %v367
    %v474 = vunpack.c.h.b16 %v367
    %v475 = vunpack.c.l.b16 %v368
    %v476 = vunpack.c.h.b16 %v368
    %v477 = vpack.c.b16 %v415, %v413
    %v478 = vpack.c.b16 %v416, %v414
    %v479 = vpack.c.b16 %v419, %v417
    %v480 = vpack.c.b16 %v420, %v418
    %v481 = vpack.c.b16 %v423, %v421
    %v482 = vpack.c.b16 %v424, %v422
    %v483 = vpack.c.b16 %v427, %v425
    %v484 = vpack.c.b16 %v428, %v426
    %v485 = vpack.c.b16 %v431, %v429
    %v486 = vpack.c.b16 %v432, %v430
    %v487 = vpack.c.b16 %v435, %v433
    %v488 = vpack.c.b16 %v436, %v434
    %v489 = vpack.c.b16 %v439, %v437
    %v490 = vpack.c.b16 %v440, %v438
    %v491 = vpack.c.b16 %v443, %v441
    %v492 = vpack.c.b16 %v444, %v442
    %v493 = vpack.c.b16 %v447, %v445
    %v494 = vpack.c.b16 %v448, %v446
    %v495 = vpack.c.b16 %v451, %v449
    %v496 = vpack.c.b16 %v452, %v450
    %v497 = vpack.c.b16 %v455, %v453
    %v498 = vpack.c.b16 %v456, %v454
    %v499 = vpack.c.b16 %v459, %v457
    %v500 = vpack.c.b16 %v460, %v458
    %v501 = vpack.c.b16 %v463, %v461
    %v502 = vpack.c.b16 %v464, %v462
    %v503 = vpack.c.b16 %v467, %v465
    %v504 = vpack.c.b16 %v468, %v466
    %v505 = vpack.c.b16 %v471, %v469
    %v506 = vpack.c.b16 %v472, %v470
    %v507 = vpack.c.b16 %v475, %v473
    %v508 = vpack.c.b16 %v476, %v474
    %541 = vmatprep.subr.bf16.mxu0 %v478
    %542 = vmatpush1.bf16.msra.mxu0 %v477
    %543 = vmatprep.subr.bf16.mxu0 %v480
    %544 = vmatpush1.bf16.msra.mxu0 %v479
    %545 = vmatprep.subr.bf16.mxu0 %v482
    %546 = vmatpush1.bf16.msra.mxu0 %v481
    %547 = vmatprep.subr.bf16.mxu0 %v484
    %548 = vmatpush1.bf16.msra.mxu0 %v483
    %549 = vmatprep.subr.bf16.mxu0 %v486
    %550 = vmatpush1.bf16.msra.mxu0 %v485
    %551 = vmatprep.subr.bf16.mxu0 %v488
    %552 = vmatpush1.bf16.msra.mxu0 %v487
    %553 = vmatprep.subr.bf16.mxu0 %v490
    %554 = vmatpush1.bf16.msra.mxu0 %v489
    %555 = vmatprep.subr.bf16.mxu0 %v492
    %556 = vmatpush1.bf16.msra.mxu0 %v491
    %557 = vmatprep.subr.bf16.mxu0 %v494
    %558 = vmatpush1.bf16.msra.mxu0 %v493
    %559 = vmatprep.subr.bf16.mxu0 %v496
    %560 = vmatpush1.bf16.msra.mxu0 %v495
    %561 = vmatprep.subr.bf16.mxu0 %v498
    %562 = vmatpush1.bf16.msra.mxu0 %v497
    %563 = vmatprep.subr.bf16.mxu0 %v500
    %564 = vmatpush1.bf16.msra.mxu0 %v499
    %565 = vmatprep.subr.bf16.mxu0 %v502
    %566 = vmatpush1.bf16.msra.mxu0 %v501
    %567 = vmatprep.subr.bf16.mxu0 %v504
    %568 = vmatpush1.bf16.msra.mxu0 %v503
    %569 = vmatprep.subr.bf16.mxu0 %v506
    %570 = vmatpush1.bf16.msra.mxu0 %v505
    %571 = vmatprep.subr.bf16.mxu0 %v508
    %572 = vmatpush1.bf16.msra.mxu0 %v507
    %573 = vmatprep.mubr.bf16.mxu0 %v336
    %574 = vmatmul.mubr.bf16.gmra.mrb[0].mxu0 %v335
    %v575 = vpop.f32.mrb[0].mxu0
    %v576 = vadd.f32 %v374, %v575
    %v577 = vpop.f32.mrb[0].mxu0
    %v578 = vadd.f32 %v378, %v577
    %v579 = vpop.f32.mrb[0].mxu0
    %v580 = vpop.f32.mrb[0].mxu0
    %581 = vdwg.mxu0
    %v582 = vmax.f32 %v576, 0.0
    %v583 = vmax.f32 %v578, 0.0
    %v584 = vpack.c.bf16 %v582, %v582
    %v585 = vpack.c.bf16 %v583, %v583
    %v586 = vld [vmem:[#allocation8] sm:$0xff]
    %v587 = vld [vmem:[#allocation8 + $0x8] sm:$0xff]
    %v588 = vld [vmem:[#allocation8 + $0x10] sm:$0xff]
    %v589 = vld [vmem:[#allocation8 + $0x18] sm:$0xff]
    %v590 = vld [vmem:[#allocation8 + $0x20] sm:$0xff]
    %v591 = vld [vmem:[#allocation8 + $0x28] sm:$0xff]
    %v592 = vld [vmem:[#allocation8 + $0x30] sm:$0xff]
    %v593 = vld [vmem:[#allocation8 + $0x38] sm:$0xff]
    %v594 = vld [vmem:[#allocation8 + $0x40] sm:$0xff]
    %v595 = vld [vmem:[#allocation8 + $0x48] sm:$0xff]
    %v596 = vld [vmem:[#allocation8 + $0x50] sm:$0xff]
    %v597 = vld [vmem:[#allocation8 + $0x58] sm:$0xff]
    %v598 = vld [vmem:[#allocation8 + $0x60] sm:$0xff]
    %v599 = vld [vmem:[#allocation8 + $0x68] sm:$0xff]
    %v600 = vld [vmem:[#allocation8 + $0x70] sm:$0xff]
    %v601 = vld [vmem:[#allocation8 + $0x78] sm:$0xff]
    %v602 = vld [vmem:[#allocation8 + $0x80] sm:$0xff]
    %v603 = vld [vmem:[#allocation8 + $0x88] sm:$0xff]
    %v604 = vld [vmem:[#allocation8 + $0x90] sm:$0xff]
    %v605 = vld [vmem:[#allocation8 + $0x98] sm:$0xff]
    %v606 = vld [vmem:[#allocation8 + $0xa0] sm:$0xff]
    %v607 = vld [vmem:[#allocation8 + $0xa8] sm:$0xff]
    %v608 = vld [vmem:[#allocation8 + $0xb0] sm:$0xff]
    %v609 = vld [vmem:[#allocation8 + $0xb8] sm:$0xff]
    %v610 = vld [vmem:[#allocation8 + $0xc0] sm:$0xff]
    %v611 = vld [vmem:[#allocation8 + $0xc8] sm:$0xff]
    %v612 = vld [vmem:[#allocation8 + $0xd0] sm:$0xff]
    %v613 = vld [vmem:[#allocation8 + $0xd8] sm:$0xff]
    %v614 = vld [vmem:[#allocation8 + $0xe0] sm:$0xff]
    %v615 = vld [vmem:[#allocation8 + $0xe8] sm:$0xff]
    %v616 = vld [vmem:[#allocation8 + $0xf0] sm:$0xff]
    %v617 = vld [vmem:[#allocation8 + $0xf8] sm:$0xff]
    %v618 = vld [vmem:[%s6] sm:$0x3]
    %v620 = vlaneseq
    %v621 = vshrl.u32 %v620, 7
    %v622 = vsub.s32 0, %v621
    %v623 = vrot.slane %v618, %v622
    %v624 = vlaneseq
    %v625 = vshrl.u32 %v624, 7
    %v626 = vsub.s32 1, %v625
    %v627 = vrot.slane %v618, %v626
    %v662 = vunpack.c.l.b16 %v586
    %v663 = vunpack.c.h.b16 %v586
    %v664 = vunpack.c.l.b16 %v587
    %v665 = vunpack.c.h.b16 %v587
    %v666 = vunpack.c.l.b16 %v588
    %v667 = vunpack.c.h.b16 %v588
    %v668 = vunpack.c.l.b16 %v589
    %v669 = vunpack.c.h.b16 %v589
    %v670 = vunpack.c.l.b16 %v590
    %v671 = vunpack.c.h.b16 %v590
    %v672 = vunpack.c.l.b16 %v591
    %v673 = vunpack.c.h.b16 %v591
    %v674 = vunpack.c.l.b16 %v592
    %v675 = vunpack.c.h.b16 %v592
    %v676 = vunpack.c.l.b16 %v593
    %v677 = vunpack.c.h.b16 %v593
    %v678 = vunpack.c.l.b16 %v594
    %v679 = vunpack.c.h.b16 %v594
    %v680 = vunpack.c.l.b16 %v595
    %v681 = vunpack.c.h.b16 %v595
    %v682 = vunpack.c.l.b16 %v596
    %v683 = vunpack.c.h.b16 %v596
    %v684 = vunpack.c.l.b16 %v597
    %v685 = vunpack.c.h.b16 %v597
    %v686 = vunpack.c.l.b16 %v598
    %v687 = vunpack.c.h.b16 %v598
    %v688 = vunpack.c.l.b16 %v599
    %v689 = vunpack.c.h.b16 %v599
    %v690 = vunpack.c.l.b16 %v600
    %v691 = vunpack.c.h.b16 %v600
    %v692 = vunpack.c.l.b16 %v601
    %v693 = vunpack.c.h.b16 %v601
    %v694 = vunpack.c.l.b16 %v602
    %v695 = vunpack.c.h.b16 %v602
    %v696 = vunpack.c.l.b16 %v603
    %v697 = vunpack.c.h.b16 %v603
    %v698 = vunpack.c.l.b16 %v604
    %v699 = vunpack.c.h.b16 %v604
    %v700 = vunpack.c.l.b16 %v605
    %v701 = vunpack.c.h.b16 %v605
    %v702 = vunpack.c.l.b16 %v606
    %v703 = vunpack.c.h.b16 %v606
    %v704 = vunpack.c.l.b16 %v607
    %v705 = vunpack.c.h.b16 %v607
    %v706 = vunpack.c.l.b16 %v608
    %v707 = vunpack.c.h.b16 %v608
    %v708 = vunpack.c.l.b16 %v609
    %v709 = vunpack.c.h.b16 %v609
    %v710 = vunpack.c.l.b16 %v610
    %v711 = vunpack.c.h.b16 %v610
    %v712 = vunpack.c.l.b16 %v611
    %v713 = vunpack.c.h.b16 %v611
    %v714 = vunpack.c.l.b16 %v612
    %v715 = vunpack.c.h.b16 %v612
    %v716 = vunpack.c.l.b16 %v613
    %v717 = vunpack.c.h.b16 %v613
    %v718 = vunpack.c.l.b16 %v614
    %v719 = vunpack.c.h.b16 %v614
    %v720 = vunpack.c.l.b16 %v615
    %v721 = vunpack.c.h.b16 %v615
    %v722 = vunpack.c.l.b16 %v616
    %v723 = vunpack.c.h.b16 %v616
    %v724 = vunpack.c.l.b16 %v617
    %v725 = vunpack.c.h.b16 %v617
    %v726 = vpack.c.b16 %v664, %v662
    %v727 = vpack.c.b16 %v665, %v663
    %v728 = vpack.c.b16 %v668, %v666
    %v729 = vpack.c.b16 %v669, %v667
    %v730 = vpack.c.b16 %v672, %v670
    %v731 = vpack.c.b16 %v673, %v671
    %v732 = vpack.c.b16 %v676, %v674
    %v733 = vpack.c.b16 %v677, %v675
    %v734 = vpack.c.b16 %v680, %v678
    %v735 = vpack.c.b16 %v681, %v679
    %v736 = vpack.c.b16 %v684, %v682
    %v737 = vpack.c.b16 %v685, %v683
    %v738 = vpack.c.b16 %v688, %v686
    %v739 = vpack.c.b16 %v689, %v687
    %v740 = vpack.c.b16 %v692, %v690
    %v741 = vpack.c.b16 %v693, %v691
    %v742 = vpack.c.b16 %v696, %v694
    %v743 = vpack.c.b16 %v697, %v695
    %v744 = vpack.c.b16 %v700, %v698
    %v745 = vpack.c.b16 %v701, %v699
    %v746 = vpack.c.b16 %v704, %v702
    %v747 = vpack.c.b16 %v705, %v703
    %v748 = vpack.c.b16 %v708, %v706
    %v749 = vpack.c.b16 %v709, %v707
    %v750 = vpack.c.b16 %v712, %v710
    %v751 = vpack.c.b16 %v713, %v711
    %v752 = vpack.c.b16 %v716, %v714
    %v753 = vpack.c.b16 %v717, %v715
    %v754 = vpack.c.b16 %v720, %v718
    %v755 = vpack.c.b16 %v721, %v719
    %v756 = vpack.c.b16 %v724, %v722
    %v757 = vpack.c.b16 %v725, %v723
    %790 = vmatprep.subr.bf16.mxu0 %v727
    %791 = vmatpush1.bf16.msra.mxu0 %v726
    %792 = vmatprep.subr.bf16.mxu0 %v729
    %793 = vmatpush1.bf16.msra.mxu0 %v728
    %794 = vmatprep.subr.bf16.mxu0 %v731
    %795 = vmatpush1.bf16.msra.mxu0 %v730
    %796 = vmatprep.subr.bf16.mxu0 %v733
    %797 = vmatpush1.bf16.msra.mxu0 %v732
    %798 = vmatprep.subr.bf16.mxu0 %v735
    %799 = vmatpush1.bf16.msra.mxu0 %v734
    %800 = vmatprep.subr.bf16.mxu0 %v737
    %801 = vmatpush1.bf16.msra.mxu0 %v736
    %802 = vmatprep.subr.bf16.mxu0 %v739
    %803 = vmatpush1.bf16.msra.mxu0 %v738
    %804 = vmatprep.subr.bf16.mxu0 %v741
    %805 = vmatpush1.bf16.msra.mxu0 %v740
    %806 = vmatprep.subr.bf16.mxu0 %v743
    %807 = vmatpush1.bf16.msra.mxu0 %v742
    %808 = vmatprep.subr.bf16.mxu0 %v745
    %809 = vmatpush1.bf16.msra.mxu0 %v744
    %810 = vmatprep.subr.bf16.mxu0 %v747
    %811 = vmatpush1.bf16.msra.mxu0 %v746
    %812 = vmatprep.subr.bf16.mxu0 %v749
    %813 = vmatpush1.bf16.msra.mxu0 %v748
    %814 = vmatprep.subr.bf16.mxu0 %v751
    %815 = vmatpush1.bf16.msra.mxu0 %v750
    %816 = vmatprep.subr.bf16.mxu0 %v753
    %817 = vmatpush1.bf16.msra.mxu0 %v752
    %818 = vmatprep.subr.bf16.mxu0 %v755
    %819 = vmatpush1.bf16.msra.mxu0 %v754
    %820 = vmatprep.subr.bf16.mxu0 %v757
    %821 = vmatpush1.bf16.msra.mxu0 %v756
    %822 = vmatprep.mubr.bf16.mxu0 %v585
    %823 = vmatmul.mubr.bf16.gmra.mrb[0].mxu0 %v584
    %v824 = vpop.f32.mrb[0].mxu0
    %v825 = vadd.f32 %v623, %v824
    %v826 = vpop.f32.mrb[0].mxu0
    %v827 = vadd.f32 %v627, %v826
    %v828 = vpop.f32.mrb[0].mxu0
    %v829 = vpop.f32.mrb[0].mxu0
    %830 = vdwg.mxu0
    %v831 = vtanh.pop %v825
    %v832 = vtanh.pop %v827
    %833 = vst [vmem:[#allocation10] sm:$0xff] %v831
    %834 = vst [vmem:[#allocation10 + $0x8] sm:$0xff] %v832
    // Predicated region
    $region46: #{tpu_custom_call.1} parent=1 // pred_check
      _
    $region47: #{tpu_custom_call.1} parent=1 // pred_check_branch
      %836 = sbr.rel (0) target = $region49
    $region48: #{tpu_custom_call.1} parent=1 // pred_region
      %s838 = ssub.s32 256, 256
      %839 = vsyncadd [#allocation4], %s838
      %s841 = sshll.u32 [#allocation10], 4
      %s842 = int_to_ptr.vmem [resolvable:$true] %s841
      %844 = dma.vmem_to_hbm [thread:$0]  %s842, 256, %s7, [#allocation4]
    $region49: #{tpu_custom_call.1} parent=1 // pred_fallthru
      _
    // Predicated region
    $region50: #{tpu_custom_call.1} parent=1 // pred_check
      _
    $region51: #{tpu_custom_call.1} parent=1 // pred_check_branch
      %846 = sbr.rel (0) target = $region53
    $region52: #{tpu_custom_call.1} parent=1 // pred_region
      %847 = dma.done [#allocation4], 256
    $region53: #{tpu_custom_call.1} parent=1 // pred_fallthru
      _
    %848 = vsyncpa [#allocation3], 1
    %849 = vsyncpa [#allocation6], 1
    %850 = vsyncpa [#allocation9], 1
    %851 = vsyncpa [#allocation4], 1

// kernel: tpu_custom_call.1
$region0: #{tpu_custom_call.1}
  #allocation0 [shape = 'u32[]', space=smem, size = 0x4, offset = 0x4, fixed_abs, tag = 'smem constant byte address 0x4 - core index']
  #allocation1 [shape = 'u32[144,128]{1,0:T(1,128)}', space=vmem, size = 0x12000, scoped, tag = 'internal scratch']
  %s0 = inlined_call_operand.hbm [shape: bf16[8,256], index: 0, kind: input, shape index: {}]
  %s1 = inlined_call_operand.hbm [shape: bf16[256,256], index: 1, kind: input, shape index: {}]
  %s2 = inlined_call_operand.vmem [shape: f32[1,256], index: 2, kind: input, shape index: {}]
  %s3 = inlined_call_operand.hbm [shape: bf16[1,256,256], index: 3, kind: input, shape index: {}]
  %s4 = inlined_call_operand.vmem [shape: f32[1,1,256], index: 4, kind: input, shape index: {}]
  %s5 = inlined_call_operand.hbm [shape: bf16[256,256], index: 5, kind: input, shape index: {}]
  %s6 = inlined_call_operand.vmem [shape: f32[1,256], index: 6, kind: input, shape index: {}]
  %s7 = inlined_call_operand.hbm [shape: f32[8,256], index: 7, kind: output, shape index: {}]
  %s8 = sld [smem:[#allocation0]]
  $region54: #{tpu_custom_call.1} parent=0
    _
  %s10 = ssub.s32 1, %s8
  %s11 = scalar_select 0, %s10, %s8
  $region1: #{tpu_custom_call.1} parent=0
    #allocation2 [shape = 'u8[4096]{0}', space=vmem, size = 0x1000, scoped, tag = 'input window, operand 0, single buffered']
    #allocation3 [shape = 's32[1]{0}', space=sflag, size = 0x4, scoped, tag = 'scoped memory for tpu_custom_call.1']
    #allocation4 [shape = 's32[1]{0}', space=sflag, size = 0x4, scoped, tag = 'scoped memory for tpu_custom_call.1']
    #allocation5 [shape = 'u8[131072]{0}', space=vmem, size = 0x20000, scoped, tag = 'input window, operand 1, single buffered']
    #allocation6 [shape = 's32[1]{0}', space=sflag, size = 0x4, scoped, tag = 'scoped memory for tpu_custom_call.1']
    #allocation7 [shape = 'u8[131072]{0}', space=vmem, size = 0x20000, scoped, tag = 'input window, operand 3, single buffered']
    #allocation8 [shape = 'u8[131072]{0}', space=vmem, size = 0x20000, scoped, tag = 'input window, operand 5, single buffered']
    #allocation9 [shape = 's32[1]{0}', space=sflag, size = 0x4, scoped, tag = 'scoped memory for tpu_custom_call.1']
    #allocation10 [shape = 'u8[8192]{0}', space=vmem, size = 0x2000, scoped, tag = 'output window, operand 0, single buffered']
    %12 = vsyncpa [#allocation3], 0
    %13 = vsyncpa [#allocation6], 0
    %14 = vsyncpa [#allocation9], 0
    %15 = vsyncpa [#allocation4], 0
    // Predicated region
    $region2: #{tpu_custom_call.1} parent=1 // pred_check
      _
    $region3: #{tpu_custom_call.1} parent=1 // pred_check_branch
      %17 = sbr.rel (0) target = $region5
    $region4: #{tpu_custom_call.1} parent=1 // pred_region
      %s19 = ssub.s32 128, 128
      %20 = vsyncadd [#allocation3], %s19
      %s22 = sshll.u32 [#allocation2], 4
      %s23 = int_to_ptr.vmem [resolvable:$true] %s22
      %25 = dma.hbm_to_vmem [thread:$0]  %s0, 128, %s23, [#allocation3]
    $region5: #{tpu_custom_call.1} parent=1 // pred_fallthru
      _
    // Predicated region
    $region6: #{tpu_custom_call.1} parent=1 // pred_check
      _
    $region7: #{tpu_custom_call.1} parent=1 // pred_check_branch
      %27 = sbr.rel (0) target = $region9
    $region8: #{tpu_custom_call.1} parent=1 // pred_region
      %s29 = ssub.s32 4096, 4096
      %30 = vsyncadd [#allocation6], %s29
      %s31 = sshll.u32 [#allocation5], 4
      %s32 = int_to_ptr.vmem [resolvable:$true] %s31
      %37 = dma.hbm_to_vmem [thread:$0]  %s1, 4096, %s32, [#allocation6], 128, 128, 8
    $region9: #{tpu_custom_call.1} parent=1 // pred_fallthru
      _
    // Predicated region
    $region10: #{tpu_custom_call.1} parent=1 // pred_check
      _
    $region11: #{tpu_custom_call.1} parent=1 // pred_check_branch
      %39 = sbr.rel (0) target = $region13
    $region12: #{tpu_custom_call.1} parent=1 // pred_region
      _
    $region13: #{tpu_custom_call.1} parent=1 // pred_fallthru
      _
    // Predicated region
    $region14: #{tpu_custom_call.1} parent=1 // pred_check
      _
    $region15: #{tpu_custom_call.1} parent=1 // pred_check_branch
      %41 = sbr.rel (0) target = $region17
    $region16: #{tpu_custom_call.1} parent=1 // pred_region
      %s43 = ssub.s32 4096, 4096
      %44 = vsyncadd [#allocation6], %s43
      %s45 = sshll.u32 [#allocation7], 4
      %s46 = int_to_ptr.vmem [resolvable:$true] %s45
      %51 = dma.hbm_to_vmem [thread:$0]  %s3, 4096, %s46, [#allocation6], 128, 128, 8
    $region17: #{tpu_custom_call.1} parent=1 // pred_fallthru
      _
    // Predicated region
    $region18: #{tpu_custom_call.1} parent=1 // pred_check
      _
    $region19: #{tpu_custom_call.1} parent=1 // pred_check_branch
      %53 = sbr.rel (0) target = $region21
    $region20: #{tpu_custom_call.1} parent=1 // pred_region
      _
    $region21: #{tpu_custom_call.1} parent=1 // pred_fallthru
      _
    // Predicated region
    $region22: #{tpu_custom_call.1} parent=1 // pred_check
      _
    $region23: #{tpu_custom_call.1} parent=1 // pred_check_branch
      %55 = sbr.rel (0) target = $region25
    $region24: #{tpu_custom_call.1} parent=1 // pred_region
      %s57 = ssub.s32 4096, 4096
      %58 = vsyncadd [#allocation9], %s57
      %s59 = sshll.u32 [#allocation8], 4
      %s60 = int_to_ptr.vmem [resolvable:$true] %s59
      %65 = dma.hbm_to_vmem [thread:$0]  %s5, 4096, %s60, [#allocation9], 128, 128, 8
    $region25: #{tpu_custom_call.1} parent=1 // pred_fallthru
      _
    // Predicated region
    $region26: #{tpu_custom_call.1} parent=1 // pred_check
      _
    $region27: #{tpu_custom_call.1} parent=1 // pred_check_branch
      %67 = sbr.rel (0) target = $region29
    $region28: #{tpu_custom_call.1} parent=1 // pred_region
      _
    $region29: #{tpu_custom_call.1} parent=1 // pred_fallthru
      _
    // Predicated region
    $region30: #{tpu_custom_call.1} parent=1 // pred_check
      _
    $region31: #{tpu_custom_call.1} parent=1 // pred_check_branch
      %69 = sbr.rel (0) target = $region33
    $region32: #{tpu_custom_call.1} parent=1 // pred_region
      %70 = dma.done [#allocation3], 128
    $region33: #{tpu_custom_call.1} parent=1 // pred_fallthru
      _
    // Predicated region
    $region34: #{tpu_custom_call.1} parent=1 // pred_check
      _
    $region35: #{tpu_custom_call.1} parent=1 // pred_check_branch
      %72 = sbr.rel (0) target = $region37
    $region36: #{tpu_custom_call.1} parent=1 // pred_region
      %73 = dma.done [#allocation6], 4096
    $region37: #{tpu_custom_call.1} parent=1 // pred_fallthru
      _
    // Predicated region
    $region38: #{tpu_custom_call.1} parent=1 // pred_check
      _
    $region39: #{tpu_custom_call.1} parent=1 // pred_check_branch
      %75 = sbr.rel (0) target = $region41
    $region40: #{tpu_custom_call.1} parent=1 // pred_region
      %76 = dma.done [#allocation6], 4096
    $region41: #{tpu_custom_call.1} parent=1 // pred_fallthru
      _
    // Predicated region
    $region42: #{tpu_custom_call.1} parent=1 // pred_check
      _
    $region43: #{tpu_custom_call.1} parent=1 // pred_check_branch
      %78 = sbr.rel (0) target = $region45
    $region44: #{tpu_custom_call.1} parent=1 // pred_region
      %79 = dma.done [#allocation9], 4096
    $region45: #{tpu_custom_call.1} parent=1 // pred_fallthru
      _
    %v80 = vld [vmem:[#allocation2] sm:$0xff]
    %v81 = vld [vmem:[#allocation5] sm:$0xff]
    %v82 = vld [vmem:[#allocation5 + $0x8] sm:$0xff]
    %v83 = vld [vmem:[#allocation5 + $0x10] sm:$0xff]
    %v84 = vld [vmem:[#allocation5 + $0x18] sm:$0xff]
    %v85 = vld [vmem:[#allocation5 + $0x20] sm:$0xff]
    %v86 = vld [vmem:[#allocation5 + $0x28] sm:$0xff]
    %v87 = vld [vmem:[#allocation5 + $0x30] sm:$0xff]
    %v88 = vld [vmem:[#allocation5 + $0x38] sm:$0xff]
    %v89 = vld [vmem:[#allocation5 + $0x40] sm:$0xff]
    %v90 = vld [vmem:[#allocation5 + $0x48] sm:$0xff]
    %v91 = vld [vmem:[#allocation5 + $0x50] sm:$0xff]
    %v92 = vld [vmem:[#allocation5 + $0x58] sm:$0xff]
    %v93 = vld [vmem:[#allocation5 + $0x60] sm:$0xff]
    %v94 = vld [vmem:[#allocation5 + $0x68] sm:$0xff]
    %v95 = vld [vmem:[#allocation5 + $0x70] sm:$0xff]
    %v96 = vld [vmem:[#allocation5 + $0x78] sm:$0xff]
    %v97 = vld [vmem:[#allocation5 + $0x80] sm:$0xff]
    %v98 = vld [vmem:[#allocation5 + $0x88] sm:$0xff]
    %v99 = vld [vmem:[#allocation5 + $0x90] sm:$0xff]
    %v100 = vld [vmem:[#allocation5 + $0x98] sm:$0xff]
    %v101 = vld [vmem:[#allocation5 + $0xa0] sm:$0xff]
    %v102 = vld [vmem:[#allocation5 + $0xa8] sm:$0xff]
    %v103 = vld [vmem:[#allocation5 + $0xb0] sm:$0xff]
    %v104 = vld [vmem:[#allocation5 + $0xb8] sm:$0xff]
    %v105 = vld [vmem:[#allocation5 + $0xc0] sm:$0xff]
    %v106 = vld [vmem:[#allocation5 + $0xc8] sm:$0xff]
    %v107 = vld [vmem:[#allocation5 + $0xd0] sm:$0xff]
    %v108 = vld [vmem:[#allocation5 + $0xd8] sm:$0xff]
    %v109 = vld [vmem:[#allocation5 + $0xe0] sm:$0xff]
    %v110 = vld [vmem:[#allocation5 + $0xe8] sm:$0xff]
    %v111 = vld [vmem:[#allocation5 + $0xf0] sm:$0xff]
    %v112 = vld [vmem:[#allocation5 + $0xf8] sm:$0xff]
    %v113 = vld [vmem:[%s2] sm:$0x3]
    %v115 = vlaneseq
    %v116 = vshrl.u32 %v115, 7
    %v117 = vsub.s32 0, %v116
    %v118 = vrot.slane %v113, %v117
    %v119 = vlaneseq
    %v120 = vshrl.u32 %v119, 7
    %v121 = vsub.s32 1, %v120
    %v122 = vrot.slane %v113, %v121
    %v126 = vunpack.c.l.b16 %v80
    %v127 = vunpack.c.h.b16 %v80
    %v128 = vpack.c.b16 %v126, %v126
    %v129 = vpack.c.b16 %v127, %v127
    %v164 = vunpack.c.l.b16 %v81
    %v165 = vunpack.c.h.b16 %v81
    %v166 = vunpack.c.l.b16 %v82
    %v167 = vunpack.c.h.b16 %v82
    %v168 = vunpack.c.l.b16 %v83
    %v169 = vunpack.c.h.b16 %v83
    %v170 = vunpack.c.l.b16 %v84
    %v171 = vunpack.c.h.b16 %v84
    %v172 = vunpack.c.l.b16 %v85
    %v173 = vunpack.c.h.b16 %v85
    %v174 = vunpack.c.l.b16 %v86
    %v175 = vunpack.c.h.b16 %v86
    %v176 = vunpack.c.l.b16 %v87
    %v177 = vunpack.c.h.b16 %v87
    %v178 = vunpack.c.l.b16 %v88
    %v179 = vunpack.c.h.b16 %v88
    %v180 = vunpack.c.l.b16 %v89
    %v181 = vunpack.c.h.b16 %v89
    %v182 = vunpack.c.l.b16 %v90
    %v183 = vunpack.c.h.b16 %v90
    %v184 = vunpack.c.l.b16 %v91
    %v185 = vunpack.c.h.b16 %v91
    %v186 = vunpack.c.l.b16 %v92
    %v187 = vunpack.c.h.b16 %v92
    %v188 = vunpack.c.l.b16 %v93
    %v189 = vunpack.c.h.b16 %v93
    %v190 = vunpack.c.l.b16 %v94
    %v191 = vunpack.c.h.b16 %v94
    %v192 = vunpack.c.l.b16 %v95
    %v193 = vunpack.c.h.b16 %v95
    %v194 = vunpack.c.l.b16 %v96
    %v195 = vunpack.c.h.b16 %v96
    %v196 = vunpack.c.l.b16 %v97
    %v197 = vunpack.c.h.b16 %v97
    %v198 = vunpack.c.l.b16 %v98
    %v199 = vunpack.c.h.b16 %v98
    %v200 = vunpack.c.l.b16 %v99
    %v201 = vunpack.c.h.b16 %v99
    %v202 = vunpack.c.l.b16 %v100
    %v203 = vunpack.c.h.b16 %v100
    %v204 = vunpack.c.l.b16 %v101
    %v205 = vunpack.c.h.b16 %v101
    %v206 = vunpack.c.l.b16 %v102
    %v207 = vunpack.c.h.b16 %v102
    %v208 = vunpack.c.l.b16 %v103
    %v209 = vunpack.c.h.b16 %v103
    %v210 = vunpack.c.l.b16 %v104
    %v211 = vunpack.c.h.b16 %v104
    %v212 = vunpack.c.l.b16 %v105
    %v213 = vunpack.c.h.b16 %v105
    %v214 = vunpack.c.l.b16 %v106
    %v215 = vunpack.c.h.b16 %v106
    %v216 = vunpack.c.l.b16 %v107
    %v217 = vunpack.c.h.b16 %v107
    %v218 = vunpack.c.l.b16 %v108
    %v219 = vunpack.c.h.b16 %v108
    %v220 = vunpack.c.l.b16 %v109
    %v221 = vunpack.c.h.b16 %v109
    %v222 = vunpack.c.l.b16 %v110
    %v223 = vunpack.c.h.b16 %v110
    %v224 = vunpack.c.l.b16 %v111
    %v225 = vunpack.c.h.b16 %v111
    %v226 = vunpack.c.l.b16 %v112
    %v227 = vunpack.c.h.b16 %v112
    %v228 = vpack.c.b16 %v166, %v164
    %v229 = vpack.c.b16 %v167, %v165
    %v230 = vpack.c.b16 %v170, %v168
    %v231 = vpack.c.b16 %v171, %v169
    %v232 = vpack.c.b16 %v174, %v172
    %v233 = vpack.c.b16 %v175, %v173
    %v234 = vpack.c.b16 %v178, %v176
    %v235 = vpack.c.b16 %v179, %v177
    %v236 = vpack.c.b16 %v182, %v180
    %v237 = vpack.c.b16 %v183, %v181
    %v238 = vpack.c.b16 %v186, %v184
    %v239 = vpack.c.b16 %v187, %v185
    %v240 = vpack.c.b16 %v190, %v188
    %v241 = vpack.c.b16 %v191, %v189
    %v242 = vpack.c.b16 %v194, %v192
    %v243 = vpack.c.b16 %v195, %v193
    %v244 = vpack.c.b16 %v198, %v196
    %v245 = vpack.c.b16 %v199, %v197
    %v246 = vpack.c.b16 %v202, %v200
    %v247 = vpack.c.b16 %v203, %v201
    %v248 = vpack.c.b16 %v206, %v204
    %v249 = vpack.c.b16 %v207, %v205
    %v250 = vpack.c.b16 %v210, %v208
    %v251 = vpack.c.b16 %v211, %v209
    %v252 = vpack.c.b16 %v214, %v212
    %v253 = vpack.c.b16 %v215, %v213
    %v254 = vpack.c.b16 %v218, %v216
    %v255 = vpack.c.b16 %v219, %v217
    %v256 = vpack.c.b16 %v222, %v220
    %v257 = vpack.c.b16 %v223, %v221
    %v258 = vpack.c.b16 %v226, %v224
    %v259 = vpack.c.b16 %v227, %v225
    %292 = vmatprep.subr.bf16.mxu0 %v229
    %293 = vmatpush1.bf16.msra.mxu0 %v228
    %294 = vmatprep.subr.bf16.mxu0 %v231
    %295 = vmatpush1.bf16.msra.mxu0 %v230
    %296 = vmatprep.subr.bf16.mxu0 %v233
    %297 = vmatpush1.bf16.msra.mxu0 %v232
    %298 = vmatprep.subr.bf16.mxu0 %v235
    %299 = vmatpush1.bf16.msra.mxu0 %v234
    %300 = vmatprep.subr.bf16.mxu0 %v237
    %301 = vmatpush1.bf16.msra.mxu0 %v236
    %302 = vmatprep.subr.bf16.mxu0 %v239
    %303 = vmatpush1.bf16.msra.mxu0 %v238
    %304 = vmatprep.subr.bf16.mxu0 %v241
    %305 = vmatpush1.bf16.msra.mxu0 %v240
    %306 = vmatprep.subr.bf16.mxu0 %v243
    %307 = vmatpush1.bf16.msra.mxu0 %v242
    %308 = vmatprep.subr.bf16.mxu0 %v245
    %309 = vmatpush1.bf16.msra.mxu0 %v244
    %310 = vmatprep.subr.bf16.mxu0 %v247
    %311 = vmatpush1.bf16.msra.mxu0 %v246
    %312 = vmatprep.subr.bf16.mxu0 %v249
    %313 = vmatpush1.bf16.msra.mxu0 %v248
    %314 = vmatprep.subr.bf16.mxu0 %v251
    %315 = vmatpush1.bf16.msra.mxu0 %v250
    %316 = vmatprep.subr.bf16.mxu0 %v253
    %317 = vmatpush1.bf16.msra.mxu0 %v252
    %318 = vmatprep.subr.bf16.mxu0 %v255
    %319 = vmatpush1.bf16.msra.mxu0 %v254
    %320 = vmatprep.subr.bf16.mxu0 %v257
    %321 = vmatpush1.bf16.msra.mxu0 %v256
    %322 = vmatprep.subr.bf16.mxu0 %v259
    %323 = vmatpush1.bf16.msra.mxu0 %v258
    %324 = vmatprep.mubr.bf16.mxu0 %v129
    %325 = vmatmul.mubr.bf16.gmra.mrb[0].mxu0 %v128
    %v326 = vpop.f32.mrb[0].mxu0
    %v327 = vadd.f32 %v118, %v326
    %v328 = vpop.f32.mrb[0].mxu0
    %v329 = vadd.f32 %v122, %v328
    %v330 = vpop.f32.mrb[0].mxu0
    %v331 = vpop.f32.mrb[0].mxu0
    %332 = vdwg.mxu0
    %v333 = vmax.f32 %v327, 0.0
    %v334 = vmax.f32 %v329, 0.0
    %v335 = vpack.c.bf16 %v333, %v333
    %v336 = vpack.c.bf16 %v334, %v334
    %v337 = vld [vmem:[#allocation7] sm:$0xff]
    %v338 = vld [vmem:[#allocation7 + $0x8] sm:$0xff]
    %v339 = vld [vmem:[#allocation7 + $0x10] sm:$0xff]
    %v340 = vld [vmem:[#allocation7 + $0x18] sm:$0xff]
    %v341 = vld [vmem:[#allocation7 + $0x20] sm:$0xff]
    %v342 = vld [vmem:[#allocation7 + $0x28] sm:$0xff]
    %v343 = vld [vmem:[#allocation7 + $0x30] sm:$0xff]
    %v344 = vld [vmem:[#allocation7 + $0x38] sm:$0xff]
    %v345 = vld [vmem:[#allocation7 + $0x40] sm:$0xff]
    %v346 = vld [vmem:[#allocation7 + $0x48] sm:$0xff]
    %v347 = vld [vmem:[#allocation7 + $0x50] sm:$0xff]
    %v348 = vld [vmem:[#allocation7 + $0x58] sm:$0xff]
    %v349 = vld [vmem:[#allocation7 + $0x60] sm:$0xff]
    %v350 = vld [vmem:[#allocation7 + $0x68] sm:$0xff]
    %v351 = vld [vmem:[#allocation7 + $0x70] sm:$0xff]
    %v352 = vld [vmem:[#allocation7 + $0x78] sm:$0xff]
    %v353 = vld [vmem:[#allocation7 + $0x80] sm:$0xff]
    %v354 = vld [vmem:[#allocation7 + $0x88] sm:$0xff]
    %v355 = vld [vmem:[#allocation7 + $0x90] sm:$0xff]
    %v356 = vld [vmem:[#allocation7 + $0x98] sm:$0xff]
    %v357 = vld [vmem:[#allocation7 + $0xa0] sm:$0xff]
    %v358 = vld [vmem:[#allocation7 + $0xa8] sm:$0xff]
    %v359 = vld [vmem:[#allocation7 + $0xb0] sm:$0xff]
    %v360 = vld [vmem:[#allocation7 + $0xb8] sm:$0xff]
    %v361 = vld [vmem:[#allocation7 + $0xc0] sm:$0xff]
    %v362 = vld [vmem:[#allocation7 + $0xc8] sm:$0xff]
    %v363 = vld [vmem:[#allocation7 + $0xd0] sm:$0xff]
    %v364 = vld [vmem:[#allocation7 + $0xd8] sm:$0xff]
    %v365 = vld [vmem:[#allocation7 + $0xe0] sm:$0xff]
    %v366 = vld [vmem:[#allocation7 + $0xe8] sm:$0xff]
    %v367 = vld [vmem:[#allocation7 + $0xf0] sm:$0xff]
    %v368 = vld [vmem:[#allocation7 + $0xf8] sm:$0xff]
    %v369 = vld [vmem:[%s4] sm:$0x3]
    %v371 = vlaneseq
    %v372 = vshrl.u32 %v371, 7
    %v373 = vsub.s32 0, %v372
    %v374 = vrot.slane %v369, %v373
    %v375 = vlaneseq
    %v376 = vshrl.u32 %v375, 7
    %v377 = vsub.s32 1, %v376
    %v378 = vrot.slane %v369, %v377
    %v413 = vunpack.c.l.b16 %v337
    %v414 = vunpack.c.h.b16 %v337
    %v415 = vunpack.c.l.b16 %v338
    %v416 = vunpack.c.h.b16 %v338
    %v417 = vunpack.c.l.b16 %v339
    %v418 = vunpack.c.h.b16 %v339
    %v419 = vunpack.c.l.b16 %v340
    %v420 = vunpack.c.h.b16 %v340
    %v421 = vunpack.c.l.b16 %v341
    %v422 = vunpack.c.h.b16 %v341
    %v423 = vunpack.c.l.b16 %v342
    %v424 = vunpack.c.h.b16 %v342
    %v425 = vunpack.c.l.b16 %v343
    %v426 = vunpack.c.h.b16 %v343
    %v427 = vunpack.c.l.b16 %v344
    %v428 = vunpack.c.h.b16 %v344
    %v429 = vunpack.c.l.b16 %v345
    %v430 = vunpack.c.h.b16 %v345
    %v431 = vunpack.c.l.b16 %v346
    %v432 = vunpack.c.h.b16 %v346
    %v433 = vunpack.c.l.b16 %v347
    %v434 = vunpack.c.h.b16 %v347
    %v435 = vunpack.c.l.b16 %v348
    %v436 = vunpack.c.h.b16 %v348
    %v437 = vunpack.c.l.b16 %v349
    %v438 = vunpack.c.h.b16 %v349
    %v439 = vunpack.c.l.b16 %v350
    %v440 = vunpack.c.h.b16 %v350
    %v441 = vunpack.c.l.b16 %v351
    %v442 = vunpack.c.h.b16 %v351
    %v443 = vunpack.c.l.b16 %v352
    %v444 = vunpack.c.h.b16 %v352
    %v445 = vunpack.c.l.b16 %v353
    %v446 = vunpack.c.h.b16 %v353
    %v447 = vunpack.c.l.b16 %v354
    %v448 = vunpack.c.h.b16 %v354
    %v449 = vunpack.c.l.b16 %v355
    %v450 = vunpack.c.h.b16 %v355
    %v451 = vunpack.c.l.b16 %v356
    %v452 = vunpack.c.h.b16 %v356
    %v453 = vunpack.c.l.b16 %v357
    %v454 = vunpack.c.h.b16 %v357
    %v455 = vunpack.c.l.b16 %v358
    %v456 = vunpack.c.h.b16 %v358
    %v457 = vunpack.c.l.b16 %v359
    %v458 = vunpack.c.h.b16 %v359
    %v459 = vunpack.c.l.b16 %v360
    %v460 = vunpack.c.h.b16 %v360
    %v461 = vunpack.c.l.b16 %v361
    %v462 = vunpack.c.h.b16 %v361
    %v463 = vunpack.c.l.b16 %v362
    %v464 = vunpack.c.h.b16 %v362
    %v465 = vunpack.c.l.b16 %v363
    %v466 = vunpack.c.h.b16 %v363
    %v467 = vunpack.c.l.b16 %v364
    %v468 = vunpack.c.h.b16 %v364
    %v469 = vunpack.c.l.b16 %v365
    %v470 = vunpack.c.h.b16 %v365
    %v471 = vunpack.c.l.b16 %v366
    %v472 = vunpack.c.h.b16 %v366
    %v473 = vunpack.c.l.b16 %v367
    %v474 = vunpack.c.h.b16 %v367
    %v475 = vunpack.c.l.b16 %v368
    %v476 = vunpack.c.h.b16 %v368
    %v477 = vpack.c.b16 %v415, %v413
    %v478 = vpack.c.b16 %v416, %v414
    %v479 = vpack.c.b16 %v419, %v417
    %v480 = vpack.c.b16 %v420, %v418
    %v481 = vpack.c.b16 %v423, %v421
    %v482 = vpack.c.b16 %v424, %v422
    %v483 = vpack.c.b16 %v427, %v425
    %v484 = vpack.c.b16 %v428, %v426
    %v485 = vpack.c.b16 %v431, %v429
    %v486 = vpack.c.b16 %v432, %v430
    %v487 = vpack.c.b16 %v435, %v433
    %v488 = vpack.c.b16 %v436, %v434
    %v489 = vpack.c.b16 %v439, %v437
    %v490 = vpack.c.b16 %v440, %v438
    %v491 = vpack.c.b16 %v443, %v441
    %v492 = vpack.c.b16 %v444, %v442
    %v493 = vpack.c.b16 %v447, %v445
    %v494 = vpack.c.b16 %v448, %v446
    %v495 = vpack.c.b16 %v451, %v449
    %v496 = vpack.c.b16 %v452, %v450
    %v497 = vpack.c.b16 %v455, %v453
    %v498 = vpack.c.b16 %v456, %v454
    %v499 = vpack.c.b16 %v459, %v457
    %v500 = vpack.c.b16 %v460, %v458
    %v501 = vpack.c.b16 %v463, %v461
    %v502 = vpack.c.b16 %v464, %v462
    %v503 = vpack.c.b16 %v467, %v465
    %v504 = vpack.c.b16 %v468, %v466
    %v505 = vpack.c.b16 %v471, %v469
    %v506 = vpack.c.b16 %v472, %v470
    %v507 = vpack.c.b16 %v475, %v473
    %v508 = vpack.c.b16 %v476, %v474
    %541 = vmatprep.subr.bf16.mxu0 %v478
    %542 = vmatpush1.bf16.msra.mxu0 %v477
    %543 = vmatprep.subr.bf16.mxu0 %v480
    %544 = vmatpush1.bf16.msra.mxu0 %v479
    %545 = vmatprep.subr.bf16.mxu0 %v482
    %546 = vmatpush1.bf16.msra.mxu0 %v481
    %547 = vmatprep.subr.bf16.mxu0 %v484
    %548 = vmatpush1.bf16.msra.mxu0 %v483
    %549 = vmatprep.subr.bf16.mxu0 %v486
    %550 = vmatpush1.bf16.msra.mxu0 %v485
    %551 = vmatprep.subr.bf16.mxu0 %v488
    %552 = vmatpush1.bf16.msra.mxu0 %v487
    %553 = vmatprep.subr.bf16.mxu0 %v490
    %554 = vmatpush1.bf16.msra.mxu0 %v489
    %555 = vmatprep.subr.bf16.mxu0 %v492
    %556 = vmatpush1.bf16.msra.mxu0 %v491
    %557 = vmatprep.subr.bf16.mxu0 %v494
    %558 = vmatpush1.bf16.msra.mxu0 %v493
    %559 = vmatprep.subr.bf16.mxu0 %v496
    %560 = vmatpush1.bf16.msra.mxu0 %v495
    %561 = vmatprep.subr.bf16.mxu0 %v498
    %562 = vmatpush1.bf16.msra.mxu0 %v497
    %563 = vmatprep.subr.bf16.mxu0 %v500
    %564 = vmatpush1.bf16.msra.mxu0 %v499
    %565 = vmatprep.subr.bf16.mxu0 %v502
    %566 = vmatpush1.bf16.msra.mxu0 %v501
    %567 = vmatprep.subr.bf16.mxu0 %v504
    %568 = vmatpush1.bf16.msra.mxu0 %v503
    %569 = vmatprep.subr.bf16.mxu0 %v506
    %570 = vmatpush1.bf16.msra.mxu0 %v505
    %571 = vmatprep.subr.bf16.mxu0 %v508
    %572 = vmatpush1.bf16.msra.mxu0 %v507
    %573 = vmatprep.mubr.bf16.mxu0 %v336
    %574 = vmatmul.mubr.bf16.gmra.mrb[0].mxu0 %v335
    %v575 = vpop.f32.mrb[0].mxu0
    %v576 = vadd.f32 %v374, %v575
    %v577 = vpop.f32.mrb[0].mxu0
    %v578 = vadd.f32 %v378, %v577
    %v579 = vpop.f32.mrb[0].mxu0
    %v580 = vpop.f32.mrb[0].mxu0
    %581 = vdwg.mxu0
    %v582 = vmax.f32 %v576, 0.0
    %v583 = vmax.f32 %v578, 0.0
    %v584 = vpack.c.bf16 %v582, %v582
    %v585 = vpack.c.bf16 %v583, %v583
    %v586 = vld [vmem:[#allocation8] sm:$0xff]
    %v587 = vld [vmem:[#allocation8 + $0x8] sm:$0xff]
    %v588 = vld [vmem:[#allocation8 + $0x10] sm:$0xff]
    %v589 = vld [vmem:[#allocation8 + $0x18] sm:$0xff]
    %v590 = vld [vmem:[#allocation8 + $0x20] sm:$0xff]
    %v591 = vld [vmem:[#allocation8 + $0x28] sm:$0xff]
    %v592 = vld [vmem:[#allocation8 + $0x30] sm:$0xff]
    %v593 = vld [vmem:[#allocation8 + $0x38] sm:$0xff]
    %v594 = vld [vmem:[#allocation8 + $0x40] sm:$0xff]
    %v595 = vld [vmem:[#allocation8 + $0x48] sm:$0xff]
    %v596 = vld [vmem:[#allocation8 + $0x50] sm:$0xff]
    %v597 = vld [vmem:[#allocation8 + $0x58] sm:$0xff]
    %v598 = vld [vmem:[#allocation8 + $0x60] sm:$0xff]
    %v599 = vld [vmem:[#allocation8 + $0x68] sm:$0xff]
    %v600 = vld [vmem:[#allocation8 + $0x70] sm:$0xff]
    %v601 = vld [vmem:[#allocation8 + $0x78] sm:$0xff]
    %v602 = vld [vmem:[#allocation8 + $0x80] sm:$0xff]
    %v603 = vld [vmem:[#allocation8 + $0x88] sm:$0xff]
    %v604 = vld [vmem:[#allocation8 + $0x90] sm:$0xff]
    %v605 = vld [vmem:[#allocation8 + $0x98] sm:$0xff]
    %v606 = vld [vmem:[#allocation8 + $0xa0] sm:$0xff]
    %v607 = vld [vmem:[#allocation8 + $0xa8] sm:$0xff]
    %v608 = vld [vmem:[#allocation8 + $0xb0] sm:$0xff]
    %v609 = vld [vmem:[#allocation8 + $0xb8] sm:$0xff]
    %v610 = vld [vmem:[#allocation8 + $0xc0] sm:$0xff]
    %v611 = vld [vmem:[#allocation8 + $0xc8] sm:$0xff]
    %v612 = vld [vmem:[#allocation8 + $0xd0] sm:$0xff]
    %v613 = vld [vmem:[#allocation8 + $0xd8] sm:$0xff]
    %v614 = vld [vmem:[#allocation8 + $0xe0] sm:$0xff]
    %v615 = vld [vmem:[#allocation8 + $0xe8] sm:$0xff]
    %v616 = vld [vmem:[#allocation8 + $0xf0] sm:$0xff]
    %v617 = vld [vmem:[#allocation8 + $0xf8] sm:$0xff]
    %v618 = vld [vmem:[%s6] sm:$0x3]
    %v620 = vlaneseq
    %v621 = vshrl.u32 %v620, 7
    %v622 = vsub.s32 0, %v621
    %v623 = vrot.slane %v618, %v622
    %v624 = vlaneseq
    %v625 = vshrl.u32 %v624, 7
    %v626 = vsub.s32 1, %v625
    %v627 = vrot.slane %v618, %v626
    %v662 = vunpack.c.l.b16 %v586
    %v663 = vunpack.c.h.b16 %v586
    %v664 = vunpack.c.l.b16 %v587
    %v665 = vunpack.c.h.b16 %v587
    %v666 = vunpack.c.l.b16 %v588
    %v667 = vunpack.c.h.b16 %v588
    %v668 = vunpack.c.l.b16 %v589
    %v669 = vunpack.c.h.b16 %v589
    %v670 = vunpack.c.l.b16 %v590
    %v671 = vunpack.c.h.b16 %v590
    %v672 = vunpack.c.l.b16 %v591
    %v673 = vunpack.c.h.b16 %v591
    %v674 = vunpack.c.l.b16 %v592
    %v675 = vunpack.c.h.b16 %v592
    %v676 = vunpack.c.l.b16 %v593
    %v677 = vunpack.c.h.b16 %v593
    %v678 = vunpack.c.l.b16 %v594
    %v679 = vunpack.c.h.b16 %v594
    %v680 = vunpack.c.l.b16 %v595
    %v681 = vunpack.c.h.b16 %v595
    %v682 = vunpack.c.l.b16 %v596
    %v683 = vunpack.c.h.b16 %v596
    %v684 = vunpack.c.l.b16 %v597
    %v685 = vunpack.c.h.b16 %v597
    %v686 = vunpack.c.l.b16 %v598
    %v687 = vunpack.c.h.b16 %v598
    %v688 = vunpack.c.l.b16 %v599
    %v689 = vunpack.c.h.b16 %v599
    %v690 = vunpack.c.l.b16 %v600
    %v691 = vunpack.c.h.b16 %v600
    %v692 = vunpack.c.l.b16 %v601
    %v693 = vunpack.c.h.b16 %v601
    %v694 = vunpack.c.l.b16 %v602
    %v695 = vunpack.c.h.b16 %v602
    %v696 = vunpack.c.l.b16 %v603
    %v697 = vunpack.c.h.b16 %v603
    %v698 = vunpack.c.l.b16 %v604
    %v699 = vunpack.c.h.b16 %v604
    %v700 = vunpack.c.l.b16 %v605
    %v701 = vunpack.c.h.b16 %v605
    %v702 = vunpack.c.l.b16 %v606
    %v703 = vunpack.c.h.b16 %v606
    %v704 = vunpack.c.l.b16 %v607
    %v705 = vunpack.c.h.b16 %v607
    %v706 = vunpack.c.l.b16 %v608
    %v707 = vunpack.c.h.b16 %v608
    %v708 = vunpack.c.l.b16 %v609
    %v709 = vunpack.c.h.b16 %v609
    %v710 = vunpack.c.l.b16 %v610
    %v711 = vunpack.c.h.b16 %v610
    %v712 = vunpack.c.l.b16 %v611
    %v713 = vunpack.c.h.b16 %v611
    %v714 = vunpack.c.l.b16 %v612
    %v715 = vunpack.c.h.b16 %v612
    %v716 = vunpack.c.l.b16 %v613
    %v717 = vunpack.c.h.b16 %v613
    %v718 = vunpack.c.l.b16 %v614
    %v719 = vunpack.c.h.b16 %v614
    %v720 = vunpack.c.l.b16 %v615
    %v721 = vunpack.c.h.b16 %v615
    %v722 = vunpack.c.l.b16 %v616
    %v723 = vunpack.c.h.b16 %v616
    %v724 = vunpack.c.l.b16 %v617
    %v725 = vunpack.c.h.b16 %v617
    %v726 = vpack.c.b16 %v664, %v662
    %v727 = vpack.c.b16 %v665, %v663
    %v728 = vpack.c.b16 %v668, %v666
    %v729 = vpack.c.b16 %v669, %v667
    %v730 = vpack.c.b16 %v672, %v670
    %v731 = vpack.c.b16 %v673, %v671
    %v732 = vpack.c.b16 %v676, %v674
    %v733 = vpack.c.b16 %v677, %v675
    %v734 = vpack.c.b16 %v680, %v678
    %v735 = vpack.c.b16 %v681, %v679
    %v736 = vpack.c.b16 %v684, %v682
    %v737 = vpack.c.b16 %v685, %v683
    %v738 = vpack.c.b16 %v688, %v686
    %v739 = vpack.c.b16 %v689, %v687
    %v740 = vpack.c.b16 %v692, %v690
    %v741 = vpack.c.b16 %v693, %v691
    %v742 = vpack.c.b16 %v696, %v694
    %v743 = vpack.c.b16 %v697, %v695
    %v744 = vpack.c.b16 %v700, %v698
    %v745 = vpack.c.b16 %v701, %v699
    %v746 = vpack.c.b16 %v704, %v702
    %v747 = vpack.c.b16 %v705, %v703
    %v748 = vpack.c.b16 %v708, %v706
    %v749 = vpack.c.b16 %v709, %v707
    %v750 = vpack.c.b16 %v712, %v710
    %v751 = vpack.c.b16 %v713, %v711
    %v752 = vpack.c.b16 %v716, %v714
    %v753 = vpack.c.b16 %v717, %v715
    %v754 = vpack.c.b16 %v720, %v718
    %v755 = vpack.c.b16 %v721, %v719
    %v756 = vpack.c.b16 %v724, %v722
    %v757 = vpack.c.b16 %v725, %v723
    %790 = vmatprep.subr.bf16.mxu0 %v727
    %791 = vmatpush1.bf16.msra.mxu0 %v726
    %792 = vmatprep.subr.bf16.mxu0 %v729
    %793 = vmatpush1.bf16.msra.mxu0 %v728
    %794 = vmatprep.subr.bf16.mxu0 %v731
    %795 = vmatpush1.bf16.msra.mxu0 %v730
    %796 = vmatprep.subr.bf16.mxu0 %v733
    %797 = vmatpush1.bf16.msra.mxu0 %v732
    %798 = vmatprep.subr.bf16.mxu0 %v735
    %799 = vmatpush1.bf16.msra.mxu0 %v734
    %800 = vmatprep.subr.bf16.mxu0 %v737
    %801 = vmatpush1.bf16.msra.mxu0 %v736
    %802 = vmatprep.subr.bf16.mxu0 %v739
    %803 = vmatpush1.bf16.msra.mxu0 %v738
    %804 = vmatprep.subr.bf16.mxu0 %v741
    %805 = vmatpush1.bf16.msra.mxu0 %v740
    %806 = vmatprep.subr.bf16.mxu0 %v743
    %807 = vmatpush1.bf16.msra.mxu0 %v742
    %808 = vmatprep.subr.bf16.mxu0 %v745
    %809 = vmatpush1.bf16.msra.mxu0 %v744
    %810 = vmatprep.subr.bf16.mxu0 %v747
    %811 = vmatpush1.bf16.msra.mxu0 %v746
    %812 = vmatprep.subr.bf16.mxu0 %v749
    %813 = vmatpush1.bf16.msra.mxu0 %v748
    %814 = vmatprep.subr.bf16.mxu0 %v751
    %815 = vmatpush1.bf16.msra.mxu0 %v750
    %816 = vmatprep.subr.bf16.mxu0 %v753
    %817 = vmatpush1.bf16.msra.mxu0 %v752
    %818 = vmatprep.subr.bf16.mxu0 %v755
    %819 = vmatpush1.bf16.msra.mxu0 %v754
    %820 = vmatprep.subr.bf16.mxu0 %v757
    %821 = vmatpush1.bf16.msra.mxu0 %v756
    %822 = vmatprep.mubr.bf16.mxu0 %v585
    %823 = vmatmul.mubr.bf16.gmra.mrb[0].mxu0 %v584
    %v824 = vpop.f32.mrb[0].mxu0
    %v825 = vadd.f32 %v623, %v824
    %v826 = vpop.f32.mrb[0].mxu0
    %v827 = vadd.f32 %v627, %v826
    %v828 = vpop.f32.mrb[0].mxu0
    %v829 = vpop.f32.mrb[0].mxu0
    %830 = vdwg.mxu0
    %v831 = vtanh.pop %v825
    %v832 = vtanh.pop %v827
    %833 = vst [vmem:[#allocation10] sm:$0xff] %v831
    %834 = vst [vmem:[#allocation10 + $0x8] sm:$0xff] %v832
    // Predicated region
    $region46: #{tpu_custom_call.1} parent=1 // pred_check
      _
    $region47: #{tpu_custom_call.1} parent=1 // pred_check_branch
      %836 = sbr.rel (0) target = $region49
    $region48: #{tpu_custom_call.1} parent=1 // pred_region
      %s838 = ssub.s32 256, 256
      %839 = vsyncadd [#allocation4], %s838
      %s841 = sshll.u32 [#allocation10], 4
      %s842 = int_to_ptr.vmem [resolvable:$true] %s841
      %844 = dma.vmem_to_hbm [thread:$0]  %s842, 256, %s7, [#allocation4]
    $region49: #{tpu_custom_call.1} parent=1 // pred_fallthru
      _
    // Predicated region
    $region50: #{tpu_custom_call.1} parent=1 // pred_check
      _
    $region51: #{tpu_custom_call.1} parent=1 // pred_check_branch
      %846 = sbr.rel (0) target = $region53
    $region52: #{tpu_custom_call.1} parent=1 // pred_region
      %847 = dma.done [#allocation4], 256
    $region53: #{tpu_custom_call.1} parent=1 // pred_fallthru
      _
    %848 = vsyncpa [#allocation3], 1
    %849 = vsyncpa [#allocation6], 1
    %850 = vsyncpa [#allocation9], 1
    %851 = vsyncpa [#allocation4], 1

</llo_original>
